<compile_context>
chip_gen: v7x
topology: tpu7x:2x2x1
jax: 0.10.0
libtpu: 0.0.40
codegen_flags: <defaults>
</compile_context>

<pallas_src>
import jax
import jax.numpy as jnp
from jax.experimental import pallas as pl
from jax.experimental.pallas import tpu as pltpu


# ----------------------------------------------------------------------------
# Parameter init (mirrors PyTorch Linear / ConvTranspose2d default init shapes)
# ----------------------------------------------------------------------------
def init_generator_params(key, image_shape=(3, 16, 16), noise_dim=32, dim_factor=8):
    C, H, W = image_shape
    assert H % 8 == 0 and W % 8 == 0
    H_init, W_init = H // 8, W // 8
    d = dim_factor
    lin_out = 4 * d * H_init * W_init

    def u(k, shape, fan_in):
        bound = 1.0 / jnp.sqrt(fan_in)
        return jax.random.uniform(k, shape, jnp.float32, -bound, bound)

    ks = jax.random.split(key, 8)
    params = {
        "lin_w": u(ks[0], (lin_out, noise_dim), noise_dim),   # PyTorch Linear (out, in)
        "lin_b": u(ks[1], (lin_out,), noise_dim),
        "dc1_w": u(ks[2], (4 * d, 2 * d, 4, 4), 4 * d * 16),  # (Cin, Cout, K, K)
        "dc1_b": u(ks[3], (2 * d,), 4 * d * 16),
        "dc2_w": u(ks[4], (2 * d, d, 4, 4), 2 * d * 16),
        "dc2_b": u(ks[5], (d,), 2 * d * 16),
        "dc3_w": u(ks[6], (d, C, 4, 4), d * 16),
        "dc3_b": u(ks[7], (C,), d * 16),
    }
    meta = dict(C=C, H=H, W=W, H_init=H_init, W_init=W_init, dim_factor=d,
                noise_dim=noise_dim)
    return params, meta


# ----------------------------------------------------------------------------
# One-time folding of ConvTranspose2d(k=4, s=2, p=1) into a dense matrix that
# acts on NCHW-flattened activations.  out_flat = in_flat @ D + bias_flat.
# ----------------------------------------------------------------------------
def _tap_matrix(n_in, n_out, K=4, stride=2, pad=1):
    """A[i, o, k] = 1.0 iff output position o receives input i via kernel tap k
    (PyTorch ConvTranspose2d index relation:  o = stride*i - pad + k)."""
    i = jnp.arange(n_in)[:, None, None]
    o = jnp.arange(n_out)[None, :, None]
    k = jnp.arange(K)[None, None, :]
    return (o + pad - stride * i == k).astype(jnp.float32)


def _fold_conv_transpose(w, Hin, Win, K=4, stride=2, pad=1):
    """w: (Cin, Cout, K, K) -> dense (Cin*Hin*Win, Cout*Hout*Wout)."""
    Hout, Wout = Hin * stride, Win * stride
    Ah = _tap_matrix(Hin, Hout, K, stride, pad)
    Aw = _tap_matrix(Win, Wout, K, stride, pad)
    dmat = jnp.einsum("cokl,yYk,xXl->cyxoYX", w, Ah, Aw)
    return dmat.reshape(w.shape[0] * Hin * Win, w.shape[1] * Hout * Wout)


def prepare_generator_operands(params, meta):
    """Build bf16 MXU operands once at init (never re-done per forward call)."""
    d, Hi, Wi = meta["dim_factor"], meta["H_init"], meta["W_init"]
    # PyTorch views the Linear output as (B, 4d, W_init, H_init): the deconvs'
    # "height"/"width" axes are (W_init, H_init).  Mirror that exactly.
    h1, w1 = Wi, Hi

    ops = [params["lin_w"].T.astype(jnp.bfloat16),                 # (noise, 4d*Hi*Wi)
           params["lin_b"].reshape(1, -1).astype(jnp.float32)]

    layer_shapes = [("dc1", 4 * d, h1, w1),
                    ("dc2", 2 * d, 2 * h1, 2 * w1),
                    ("dc3", d, 4 * h1, 4 * w1)]
    for name, cin, hh, ww in layer_shapes:
        w = params[f"{name}_w"]
        assert w.shape[0] == cin
        ops.append(_fold_conv_transpose(w, hh, ww).astype(jnp.bfloat16))
        ops.append(jnp.repeat(params[f"{name}_b"], 4 * hh * ww)     # Hout*Wout copies
                   .reshape(1, -1).astype(jnp.float32))
    return tuple(ops)


# ----------------------------------------------------------------------------
# Fused Pallas kernel: the entire generator in one VMEM-resident body.
# ----------------------------------------------------------------------------
def _generator_kernel(x_ref, w0_ref, b0_ref, d1_ref, c1_ref, d2_ref, c2_ref,
                      d3_ref, c3_ref, o_ref):
    def layer(h, w_ref, b_ref, act):
        # bf16 MXU operands, f32 accumulation; bias + activation on the VPU/EUP.
        y = jnp.dot(h.astype(jnp.bfloat16), w_ref[...],
                    preferred_element_type=jnp.float32) + b_ref[...]
        return jnp.maximum(y, 0.0) if act == "relu" else jnp.tanh(y)

    h = layer(x_ref[...], w0_ref, b0_ref, "relu")      # Linear          (B, 128)
    h = layer(h, d1_ref, c1_ref, "relu")               # deconv1 folded  (B, 256)
    h = layer(h, d2_ref, c2_ref, "relu")               # deconv2 folded  (B, 512)
    o_ref[...] = layer(h, d3_ref, c3_ref, "tanh").astype(o_ref.dtype)  # (B, 768)


def generator_forward(operands, meta, X):
    """X: (B, noise_dim) noise -> (B, C, H, W) images in [-1, 1]."""
    B = X.shape[0]
    C = meta["C"]
    noise = meta["noise_dim"]
    n_out = C * meta["H"] * meta["W"]

    # Row tiling: one block for small batches (no padding, no wasted MXU rows);
    # 128-row blocks (a "parallel" grid -> megacore-shardable) for big batches.
    row_block = B if B <= 128 else 128
    Bp = pl.cdiv(B, row_block) * row_block
    if Bp != B:
        X = jnp.pad(X, ((0, Bp - B), (0, 0)))

    w0, b0, d1, c1, d2, c2, d3, c3 = operands
    const = lambda arr: pl.BlockSpec(arr.shape, lambda i: (0, 0))

    out = pl.pallas_call(
        _generator_kernel,
        out_shape=jax.ShapeDtypeStruct((Bp, n_out), jnp.float32),
        grid=(Bp // row_block,),
        in_specs=[
            pl.BlockSpec((row_block, noise), lambda i: (i, 0)),
            const(w0), const(b0),
            const(d1), const(c1),
            const(d2), const(c2),
            const(d3), const(c3),
        ],
        out_specs=pl.BlockSpec((row_block, n_out), lambda i: (i, 0)),
        compiler_params=pltpu.CompilerParams(
            dimension_semantics=("parallel",)),
    )(X, w0, b0, d1, c1, d2, c2, d3, c3)

    # Flat order is exactly the NCHW order produced by the PyTorch chain
    # (which, via its view, yields spatial dims (8*W_init, 8*H_init)); a plain
    # reshape — no transpose — recovers the image.  Identical to (H, W) here.
    return out[:B].reshape(B, C, 8 * meta["W_init"], 8 * meta["H_init"])


# ----------------------------------------------------------------------------
# Pure-JAX f32 reference of the original module (for a parity check only).
# ----------------------------------------------------------------------------
def _conv_transpose2d_ref(x, w, b):
    B, Cin, H, W = x.shape
    _, Cout, K, _ = w.shape
    stride, pad = 2, 1
    OH, OW = H * stride, W * stride
    Hd, Wd = (H - 1) * stride + 1, (W - 1) * stride + 1
    x_dil = jnp.zeros((B, Cin, Hd, Wd), x.dtype).at[:, :, ::stride, ::stride].set(x)
    p = K - 1 - pad
    x_pad = jnp.pad(x_dil, ((0, 0), (0, 0), (p, p), (p, p)))
    patches = jnp.stack(
        [x_pad[:, :, kh:kh + OH, kw:kw + OW] for kh in range(K) for kw in range(K)],
        axis=-1)
    a = patches.transpose(0, 2, 3, 1, 4).reshape(B * OH * OW, Cin * K * K)
    w_conv = jnp.flip(w, (2, 3)).transpose(0, 2, 3, 1).reshape(Cin * K * K, Cout)
    y = a @ w_conv + b
    return y.reshape(B, OH, OW, Cout).transpose(0, 3, 1, 2)


def _generator_ref(params, meta, X):
    d, Hi, Wi = meta["dim_factor"], meta["H_init"], meta["W_init"]
    H1 = jnp.maximum(X @ params["lin_w"].T + params["lin_b"], 0.0)
    H1r = H1.reshape(X.shape[0], 4 * d, Wi, Hi)
    H2 = jnp.maximum(_conv_transpose2d_ref(H1r, params["dc1_w"], params["dc1_b"]), 0.0)
    H3 = jnp.maximum(_conv_transpose2d_ref(H2, params["dc2_w"], params["dc2_b"]), 0.0)
    return jnp.tanh(_conv_transpose2d_ref(H3, params["dc3_w"], params["dc3_b"]))


if __name__ == "__main__":
    key = jax.random.PRNGKey(0)
    k_params, k_noise = jax.random.split(key)

    image_shape = (3, 16, 16)   # (C, H, W)
    noise_dim = 32
    dim_factor = 8
    batch = 2

    params, meta = init_generator_params(k_params, image_shape, noise_dim, dim_factor)
    operands = prepare_generator_operands(params, meta)   # one-time folding, off hot path
    X = jax.random.normal(k_noise, (batch, noise_dim), jnp.float32)

    fwd = jax.jit(lambda x: generator_forward(operands, meta, x))
    img = jax.block_until_ready(fwd(X))

    assert img.shape == (batch, *image_shape), img.shape
    assert bool(jnp.all(jnp.isfinite(img)))
    assert bool(jnp.all(jnp.abs(img) <= 1.0 + 1e-6))       # tanh output range

    # Parity vs. the f32 pure-JAX reference (bf16 MXU operands -> small diffs OK).
    img_ref = _generator_ref(params, meta, X)
    max_err = float(jnp.max(jnp.abs(img - img_ref)))
    assert max_err < 3e-2, f"parity mismatch: max abs err {max_err}"

    print("KERNEL_OK")
</pallas_src>

<mosaic_0001>
module attributes {stable_mosaic.version = 11 : i64} {
  func.func @_generator_kernel(%arg0: i32, %arg1: memref<2x32xf32, #tpu.memory_space<vmem>>, %arg2: memref<32x128xbf16, #tpu.memory_space<vmem>>, %arg3: memref<1x128xf32, #tpu.memory_space<vmem>>, %arg4: memref<128x256xbf16, #tpu.memory_space<vmem>>, %arg5: memref<1x256xf32, #tpu.memory_space<vmem>>, %arg6: memref<256x512xbf16, #tpu.memory_space<vmem>>, %arg7: memref<1x512xf32, #tpu.memory_space<vmem>>, %arg8: memref<512x768xbf16, #tpu.memory_space<vmem>>, %arg9: memref<1x768xf32, #tpu.memory_space<vmem>>, %arg10: memref<2x768xf32, #tpu.memory_space<vmem>>) attributes {dimension_semantics = [#tpu.dimension_semantics<parallel>], iteration_bounds = array<i64: 1>, scalar_prefetch = 0 : i64, scratch_operands = 0 : i64, tpu.core_type = #tpu.core_type<tc>, window_params = [{transform_indices = @transform_0, window_bounds = array<i64: 2, 32>}, {pipeline_mode = #tpu.pipeline_mode<synchronous>, transform_indices = @transform_1, window_bounds = array<i64: 32, 128>}, {pipeline_mode = #tpu.pipeline_mode<synchronous>, transform_indices = @transform_2, window_bounds = array<i64: 1, 128>}, {pipeline_mode = #tpu.pipeline_mode<synchronous>, transform_indices = @transform_3, window_bounds = array<i64: 128, 256>}, {pipeline_mode = #tpu.pipeline_mode<synchronous>, transform_indices = @transform_4, window_bounds = array<i64: 1, 256>}, {pipeline_mode = #tpu.pipeline_mode<synchronous>, transform_indices = @transform_5, window_bounds = array<i64: 256, 512>}, {pipeline_mode = #tpu.pipeline_mode<synchronous>, transform_indices = @transform_6, window_bounds = array<i64: 1, 512>}, {pipeline_mode = #tpu.pipeline_mode<synchronous>, transform_indices = @transform_7, window_bounds = array<i64: 512, 768>}, {pipeline_mode = #tpu.pipeline_mode<synchronous>, transform_indices = @transform_8, window_bounds = array<i64: 1, 768>}, {transform_indices = @transform_9, window_bounds = array<i64: 2, 768>}]} {
    %c0 = arith.constant 0 : index
    %c0_0 = arith.constant 0 : index
    %0 = vector.load %arg1[%c0, %c0_0] : memref<2x32xf32, #tpu.memory_space<vmem>>, vector<2x32xf32>
    %1 = arith.truncf %0 : vector<2x32xf32> to vector<2x32xbf16>
    %c0_1 = arith.constant 0 : index
    %c0_2 = arith.constant 0 : index
    %2 = vector.load %arg2[%c0_1, %c0_2] : memref<32x128xbf16, #tpu.memory_space<vmem>>, vector<32x128xbf16>
    %cst = arith.constant dense<0.000000e+00> : vector<2x128xf32>
    %3 = tpu.matmul %1, %2, %cst {dimension_numbers = #tpu.dot_dimension_numbers<[1], [0], [0], [1], [0, 0, 1, 1], [], []>} : vector<2x32xbf16>, vector<32x128xbf16>, vector<2x128xf32> -> vector<2x128xf32>
    %c0_3 = arith.constant 0 : index
    %c0_4 = arith.constant 0 : index
    %4 = vector.load %arg3[%c0_3, %c0_4] : memref<1x128xf32, #tpu.memory_space<vmem>>, vector<1x128xf32>
    %5 = vector.broadcast %4 : vector<1x128xf32> to vector<2x128xf32>
    %6 = arith.addf %3, %5 : vector<2x128xf32>
    %cst_5 = arith.constant 0.000000e+00 : f32
    %7 = vector.broadcast %cst_5 : f32 to vector<2x128xf32>
    %8 = arith.maximumf %6, %7 : vector<2x128xf32>
    %9 = arith.truncf %8 : vector<2x128xf32> to vector<2x128xbf16>
    %c0_6 = arith.constant 0 : index
    %c0_7 = arith.constant 0 : index
    %10 = vector.load %arg4[%c0_6, %c0_7] : memref<128x256xbf16, #tpu.memory_space<vmem>>, vector<128x256xbf16>
    %cst_8 = arith.constant dense<0.000000e+00> : vector<2x256xf32>
    %11 = tpu.matmul %9, %10, %cst_8 {dimension_numbers = #tpu.dot_dimension_numbers<[1], [0], [0], [1], [0, 0, 1, 1], [], []>} : vector<2x128xbf16>, vector<128x256xbf16>, vector<2x256xf32> -> vector<2x256xf32>
    %c0_9 = arith.constant 0 : index
    %c0_10 = arith.constant 0 : index
    %12 = vector.load %arg5[%c0_9, %c0_10] : memref<1x256xf32, #tpu.memory_space<vmem>>, vector<1x256xf32>
    %13 = vector.broadcast %12 : vector<1x256xf32> to vector<2x256xf32>
    %14 = arith.addf %11, %13 : vector<2x256xf32>
    %cst_11 = arith.constant 0.000000e+00 : f32
    %15 = vector.broadcast %cst_11 : f32 to vector<2x256xf32>
    %16 = arith.maximumf %14, %15 : vector<2x256xf32>
    %17 = arith.truncf %16 : vector<2x256xf32> to vector<2x256xbf16>
    %c0_12 = arith.constant 0 : index
    %c0_13 = arith.constant 0 : index
    %18 = vector.load %arg6[%c0_12, %c0_13] : memref<256x512xbf16, #tpu.memory_space<vmem>>, vector<256x512xbf16>
    %cst_14 = arith.constant dense<0.000000e+00> : vector<2x512xf32>
    %19 = tpu.matmul %17, %18, %cst_14 {dimension_numbers = #tpu.dot_dimension_numbers<[1], [0], [0], [1], [0, 0, 1, 1], [], []>} : vector<2x256xbf16>, vector<256x512xbf16>, vector<2x512xf32> -> vector<2x512xf32>
    %c0_15 = arith.constant 0 : index
    %c0_16 = arith.constant 0 : index
    %20 = vector.load %arg7[%c0_15, %c0_16] : memref<1x512xf32, #tpu.memory_space<vmem>>, vector<1x512xf32>
    %21 = vector.broadcast %20 : vector<1x512xf32> to vector<2x512xf32>
    %22 = arith.addf %19, %21 : vector<2x512xf32>
    %cst_17 = arith.constant 0.000000e+00 : f32
    %23 = vector.broadcast %cst_17 : f32 to vector<2x512xf32>
    %24 = arith.maximumf %22, %23 : vector<2x512xf32>
    %25 = arith.truncf %24 : vector<2x512xf32> to vector<2x512xbf16>
    %c0_18 = arith.constant 0 : index
    %c0_19 = arith.constant 0 : index
    %26 = vector.load %arg8[%c0_18, %c0_19] : memref<512x768xbf16, #tpu.memory_space<vmem>>, vector<512x768xbf16>
    %cst_20 = arith.constant dense<0.000000e+00> : vector<2x768xf32>
    %27 = tpu.matmul %25, %26, %cst_20 {dimension_numbers = #tpu.dot_dimension_numbers<[1], [0], [0], [1], [0, 0, 1, 1], [], []>} : vector<2x512xbf16>, vector<512x768xbf16>, vector<2x768xf32> -> vector<2x768xf32>
    %c0_21 = arith.constant 0 : index
    %c0_22 = arith.constant 0 : index
    %28 = vector.load %arg9[%c0_21, %c0_22] : memref<1x768xf32, #tpu.memory_space<vmem>>, vector<1x768xf32>
    %29 = vector.broadcast %28 : vector<1x768xf32> to vector<2x768xf32>
    %30 = arith.addf %27, %29 : vector<2x768xf32>
    %31 = math.tanh %30 : vector<2x768xf32>
    %c0_23 = arith.constant 0 : index
    %c0_24 = arith.constant 0 : index
    %32 = vector.load %arg10[%c0_23, %c0_24] : memref<2x768xf32, #tpu.memory_space<vmem>>, vector<2x768xf32>
    tpu.vector_store %arg10[%c0_23, %c0_24], %31 {strides = array<i32>} : memref<2x768xf32, #tpu.memory_space<vmem>>, vector<2x768xf32>,
    return
  }
  func.func @transform_0(%arg0: i32) -> (i32, i32) {
    %c0_i32 = arith.constant 0 : i32
    %c0_i32_0 = arith.constant 0 : i32
    return %arg0, %c0_i32 : i32, i32
  }
  func.func @transform_1(%arg0: i32) -> (i32, i32) {
    %c0_i32 = arith.constant 0 : i32
    %c0_i32_0 = arith.constant 0 : i32
    %c0_i32_1 = arith.constant 0 : i32
    return %c0_i32, %c0_i32_0 : i32, i32
  }
  func.func @transform_2(%arg0: i32) -> (i32, i32) {
    %c0_i32 = arith.constant 0 : i32
    %c0_i32_0 = arith.constant 0 : i32
    %c0_i32_1 = arith.constant 0 : i32
    return %c0_i32, %c0_i32_0 : i32, i32
  }
  func.func @transform_3(%arg0: i32) -> (i32, i32) {
    %c0_i32 = arith.constant 0 : i32
    %c0_i32_0 = arith.constant 0 : i32
    %c0_i32_1 = arith.constant 0 : i32
    return %c0_i32, %c0_i32_0 : i32, i32
  }
  func.func @transform_4(%arg0: i32) -> (i32, i32) {
    %c0_i32 = arith.constant 0 : i32
    %c0_i32_0 = arith.constant 0 : i32
    %c0_i32_1 = arith.constant 0 : i32
    return %c0_i32, %c0_i32_0 : i32, i32
  }
  func.func @transform_5(%arg0: i32) -> (i32, i32) {
    %c0_i32 = arith.constant 0 : i32
    %c0_i32_0 = arith.constant 0 : i32
    %c0_i32_1 = arith.constant 0 : i32
    return %c0_i32, %c0_i32_0 : i32, i32
  }
  func.func @transform_6(%arg0: i32) -> (i32, i32) {
    %c0_i32 = arith.constant 0 : i32
    %c0_i32_0 = arith.constant 0 : i32
    %c0_i32_1 = arith.constant 0 : i32
    return %c0_i32, %c0_i32_0 : i32, i32
  }
  func.func @transform_7(%arg0: i32) -> (i32, i32) {
    %c0_i32 = arith.constant 0 : i32
    %c0_i32_0 = arith.constant 0 : i32
    %c0_i32_1 = arith.constant 0 : i32
    return %c0_i32, %c0_i32_0 : i32, i32
  }
  func.func @transform_8(%arg0: i32) -> (i32, i32) {
    %c0_i32 = arith.constant 0 : i32
    %c0_i32_0 = arith.constant 0 : i32
    %c0_i32_1 = arith.constant 0 : i32
    return %c0_i32, %c0_i32_0 : i32, i32
  }
  func.func @transform_9(%arg0: i32) -> (i32, i32) {
    %c0_i32 = arith.constant 0 : i32
    %c0_i32_0 = arith.constant 0 : i32
    return %arg0, %c0_i32 : i32, i32
  }
}

</mosaic_0001>

<llo_original>
// kernel: _lambda_.1
$region0: #{_lambda_.1}
  #allocation0 [shape = 'u32[]', space=smem, size = 0x4, offset = 0x4, fixed_abs, tag = 'smem constant byte address 0x4 - core index']
  #allocation1 [shape = 'u32[144,128]{1,0:T(1,128)}', space=vmem, size = 0x12000, scoped, tag = 'internal scratch']
  %s0 = inlined_call_operand.vmem [shape: f32[2,32], index: 0, kind: input, shape index: {}]
  %s1 = inlined_call_operand.vmem [shape: bf16[32,128], index: 1, kind: input, shape index: {}]
  %s2 = inlined_call_operand.vmem [shape: f32[1,128], index: 2, kind: input, shape index: {}]
  %s3 = inlined_call_operand.vmem [shape: bf16[128,256], index: 3, kind: input, shape index: {}]
  %s4 = inlined_call_operand.vmem [shape: f32[1,256], index: 4, kind: input, shape index: {}]
  %s5 = inlined_call_operand.vmem [shape: bf16[256,512], index: 5, kind: input, shape index: {}]
  %s6 = inlined_call_operand.vmem [shape: f32[1,512], index: 6, kind: input, shape index: {}]
  %s7 = inlined_call_operand.vmem [shape: bf16[512,768], index: 7, kind: input, shape index: {}]
  %s8 = inlined_call_operand.vmem [shape: f32[1,768], index: 8, kind: input, shape index: {}]
  %s9 = inlined_call_operand.vmem [shape: f32[2,768], index: 9, kind: output, shape index: {}]
  %s10 = sld [smem:[#allocation0]]
  $region46: #{_lambda_.1} parent=0
    _
  %s12 = ssub.s32 1, %s10
  %s13 = scalar_select 0, %s12, %s10
  // Predicated region
  $region2: #{_lambda_.1} parent=0 // pred_check
    _
  $region3: #{_lambda_.1} parent=0 // pred_check_branch
    %15 = sbr.rel (0) target = $region5
  $region4: #{_lambda_.1} parent=0 // pred_region
    _
  $region5: #{_lambda_.1} parent=0 // pred_fallthru
    _
  // Predicated region
  $region6: #{_lambda_.1} parent=0 // pred_check
    _
  $region7: #{_lambda_.1} parent=0 // pred_check_branch
    %17 = sbr.rel (0) target = $region9
  $region8: #{_lambda_.1} parent=0 // pred_region
    _
  $region9: #{_lambda_.1} parent=0 // pred_fallthru
    _
  // Predicated region
  $region10: #{_lambda_.1} parent=0 // pred_check
    _
  $region11: #{_lambda_.1} parent=0 // pred_check_branch
    %19 = sbr.rel (0) target = $region13
  $region12: #{_lambda_.1} parent=0 // pred_region
    _
  $region13: #{_lambda_.1} parent=0 // pred_fallthru
    _
  // Predicated region
  $region14: #{_lambda_.1} parent=0 // pred_check
    _
  $region15: #{_lambda_.1} parent=0 // pred_check_branch
    %21 = sbr.rel (0) target = $region17
  $region16: #{_lambda_.1} parent=0 // pred_region
    _
  $region17: #{_lambda_.1} parent=0 // pred_fallthru
    _
  // Predicated region
  $region18: #{_lambda_.1} parent=0 // pred_check
    _
  $region19: #{_lambda_.1} parent=0 // pred_check_branch
    %23 = sbr.rel (0) target = $region21
  $region20: #{_lambda_.1} parent=0 // pred_region
    _
  $region21: #{_lambda_.1} parent=0 // pred_fallthru
    _
  // Predicated region
  $region22: #{_lambda_.1} parent=0 // pred_check
    _
  $region23: #{_lambda_.1} parent=0 // pred_check_branch
    %25 = sbr.rel (0) target = $region25
  $region24: #{_lambda_.1} parent=0 // pred_region
    _
  $region25: #{_lambda_.1} parent=0 // pred_fallthru
    _
  // Predicated region
  $region26: #{_lambda_.1} parent=0 // pred_check
    _
  $region27: #{_lambda_.1} parent=0 // pred_check_branch
    %27 = sbr.rel (0) target = $region29
  $region28: #{_lambda_.1} parent=0 // pred_region
    _
  $region29: #{_lambda_.1} parent=0 // pred_fallthru
    _
  // Predicated region
  $region30: #{_lambda_.1} parent=0 // pred_check
    _
  $region31: #{_lambda_.1} parent=0 // pred_check_branch
    %29 = sbr.rel (0) target = $region33
  $region32: #{_lambda_.1} parent=0 // pred_region
    _
  $region33: #{_lambda_.1} parent=0 // pred_fallthru
    _
  // Predicated region
  $region34: #{_lambda_.1} parent=0 // pred_check
    _
  $region35: #{_lambda_.1} parent=0 // pred_check_branch
    %31 = sbr.rel (0) target = $region37
  $region36: #{_lambda_.1} parent=0 // pred_region
    _
  $region37: #{_lambda_.1} parent=0 // pred_fallthru
    _
  %v33 = vld [vmem:[%s0] sm:$0x3]
  %v34 = vpack.c.bf16 %v33, %v33
  %v35 = vld [vmem:[%s1] sm:$0xf]
  %v36 = vld [vmem:[%s1 + $0x4] sm:$0xf]
  %v37 = vld [vmem:[%s1 + $0x8] sm:$0xf]
  %v38 = vld [vmem:[%s1 + $0xc] sm:$0xf]
  %v39 = vld [vmem:[%s2] sm:$0x1]
  %v41 = vlaneseq
  %v42 = vshrl.u32 %v41, 7
  %v43 = vsub.s32 0, %v42
  %v44 = vrot.slane %v39, %v43
  %v50 = vunpack.c.l.b16 %v35
  %v51 = vunpack.c.l.b16 %v36
  %v52 = vunpack.c.l.b16 %v37
  %v53 = vunpack.c.l.b16 %v38
  %v54 = vpack.c.b16 %v51, %v50
  %v55 = vpack.c.b16 %v53, %v52
  %vm58 = vcmask 261120
  %v60 = vsel %vm58, %v34, 0
  %62 = vmatprep.subr.bf16.mxu0 0
  %63 = vmatpush1.bf16.msra.mxu0 %v54
  %64 = vmatprep.subr.bf16.mxu0 0
  %65 = vmatpush1.bf16.msra.mxu0 %v55
  %66 = vmatprep.subr.bf16.mxu0 0
  %67 = vmatpush1.bf16.msra.mxu0 0
  %68 = vmatprep.subr.bf16.mxu0 0
  %69 = vmatpush1.bf16.msra.mxu0 0
  %70 = vmatprep.subr.bf16.mxu0 0
  %71 = vmatpush1.bf16.msra.mxu0 0
  %72 = vmatprep.subr.bf16.mxu0 0
  %73 = vmatpush1.bf16.msra.mxu0 0
  %74 = vmatprep.subr.bf16.mxu0 0
  %75 = vmatpush1.bf16.msra.mxu0 0
  %76 = vmatprep.subr.bf16.mxu0 0
  %77 = vmatpush1.bf16.msra.mxu0 0
  %78 = vmatprep.subr.bf16.mxu0 0
  %79 = vmatpush1.bf16.msra.mxu0 0
  %80 = vmatprep.subr.bf16.mxu0 0
  %81 = vmatpush1.bf16.msra.mxu0 0
  %82 = vmatprep.subr.bf16.mxu0 0
  %83 = vmatpush1.bf16.msra.mxu0 0
  %84 = vmatprep.subr.bf16.mxu0 0
  %85 = vmatpush1.bf16.msra.mxu0 0
  %86 = vmatprep.subr.bf16.mxu0 0
  %87 = vmatpush1.bf16.msra.mxu0 0
  %88 = vmatprep.subr.bf16.mxu0 0
  %89 = vmatpush1.bf16.msra.mxu0 0
  %90 = vmatprep.subr.bf16.mxu0 0
  %91 = vmatpush1.bf16.msra.mxu0 0
  %92 = vmatprep.subr.bf16.mxu0 0
  %93 = vmatpush1.bf16.msra.mxu0 0
  %94 = vmatprep.mubr.bf16.mxu0 0
  %95 = vmatmul.mubr.bf16.gmra.mrb[0].mxu0 %v60
  %v96 = vpop.f32.mrb[0].mxu0
  %v97 = vadd.f32 %v44, %v96
  %v98 = vpop.f32.mrb[0].mxu0
  %v99 = vpop.f32.mrb[0].mxu0
  %v100 = vpop.f32.mrb[0].mxu0
  %101 = vdwg.mxu0
  %v102 = vmax.f32 %v97, 0.0
  %v103 = vpack.c.bf16 %v102, %v102
  %v104 = vld [vmem:[%s3] sm:$0xff]
  %v105 = vld [vmem:[%s3 + $0x8] sm:$0xff]
  %v106 = vld [vmem:[%s3 + $0x10] sm:$0xff]
  %v107 = vld [vmem:[%s3 + $0x18] sm:$0xff]
  %v108 = vld [vmem:[%s3 + $0x20] sm:$0xff]
  %v109 = vld [vmem:[%s3 + $0x28] sm:$0xff]
  %v110 = vld [vmem:[%s3 + $0x30] sm:$0xff]
  %v111 = vld [vmem:[%s3 + $0x38] sm:$0xff]
  %v112 = vld [vmem:[%s3 + $0x40] sm:$0xff]
  %v113 = vld [vmem:[%s3 + $0x48] sm:$0xff]
  %v114 = vld [vmem:[%s3 + $0x50] sm:$0xff]
  %v115 = vld [vmem:[%s3 + $0x58] sm:$0xff]
  %v116 = vld [vmem:[%s3 + $0x60] sm:$0xff]
  %v117 = vld [vmem:[%s3 + $0x68] sm:$0xff]
  %v118 = vld [vmem:[%s3 + $0x70] sm:$0xff]
  %v119 = vld [vmem:[%s3 + $0x78] sm:$0xff]
  %v120 = vld [vmem:[%s4] sm:$0x3]
  %v122 = vlaneseq
  %v123 = vshrl.u32 %v122, 7
  %v124 = vsub.s32 0, %v123
  %v125 = vrot.slane %v120, %v124
  %v126 = vlaneseq
  %v127 = vshrl.u32 %v126, 7
  %v128 = vsub.s32 1, %v127
  %v129 = vrot.slane %v120, %v128
  %v148 = vunpack.c.l.b16 %v104
  %v149 = vunpack.c.h.b16 %v104
  %v150 = vunpack.c.l.b16 %v105
  %v151 = vunpack.c.h.b16 %v105
  %v152 = vunpack.c.l.b16 %v106
  %v153 = vunpack.c.h.b16 %v106
  %v154 = vunpack.c.l.b16 %v107
  %v155 = vunpack.c.h.b16 %v107
  %v156 = vunpack.c.l.b16 %v108
  %v157 = vunpack.c.h.b16 %v108
  %v158 = vunpack.c.l.b16 %v109
  %v159 = vunpack.c.h.b16 %v109
  %v160 = vunpack.c.l.b16 %v110
  %v161 = vunpack.c.h.b16 %v110
  %v162 = vunpack.c.l.b16 %v111
  %v163 = vunpack.c.h.b16 %v111
  %v164 = vunpack.c.l.b16 %v112
  %v165 = vunpack.c.h.b16 %v112
  %v166 = vunpack.c.l.b16 %v113
  %v167 = vunpack.c.h.b16 %v113
  %v168 = vunpack.c.l.b16 %v114
  %v169 = vunpack.c.h.b16 %v114
  %v170 = vunpack.c.l.b16 %v115
  %v171 = vunpack.c.h.b16 %v115
  %v172 = vunpack.c.l.b16 %v116
  %v173 = vunpack.c.h.b16 %v116
  %v174 = vunpack.c.l.b16 %v117
  %v175 = vunpack.c.h.b16 %v117
  %v176 = vunpack.c.l.b16 %v118
  %v177 = vunpack.c.h.b16 %v118
  %v178 = vunpack.c.l.b16 %v119
  %v179 = vunpack.c.h.b16 %v119
  %v180 = vpack.c.b16 %v150, %v148
  %v181 = vpack.c.b16 %v151, %v149
  %v182 = vpack.c.b16 %v154, %v152
  %v183 = vpack.c.b16 %v155, %v153
  %v184 = vpack.c.b16 %v158, %v156
  %v185 = vpack.c.b16 %v159, %v157
  %v186 = vpack.c.b16 %v162, %v160
  %v187 = vpack.c.b16 %v163, %v161
  %v188 = vpack.c.b16 %v166, %v164
  %v189 = vpack.c.b16 %v167, %v165
  %v190 = vpack.c.b16 %v170, %v168
  %v191 = vpack.c.b16 %v171, %v169
  %v192 = vpack.c.b16 %v174, %v172
  %v193 = vpack.c.b16 %v175, %v173
  %v194 = vpack.c.b16 %v178, %v176
  %v195 = vpack.c.b16 %v179, %v177
  %212 = vmatprep.subr.bf16.mxu0 %v181
  %213 = vmatpush1.bf16.msra.mxu0 %v180
  %214 = vmatprep.subr.bf16.mxu0 %v183
  %215 = vmatpush1.bf16.msra.mxu0 %v182
  %216 = vmatprep.subr.bf16.mxu0 %v185
  %217 = vmatpush1.bf16.msra.mxu0 %v184
  %218 = vmatprep.subr.bf16.mxu0 %v187
  %219 = vmatpush1.bf16.msra.mxu0 %v186
  %220 = vmatprep.subr.bf16.mxu0 %v189
  %221 = vmatpush1.bf16.msra.mxu0 %v188
  %222 = vmatprep.subr.bf16.mxu0 %v191
  %223 = vmatpush1.bf16.msra.mxu0 %v190
  %224 = vmatprep.subr.bf16.mxu0 %v193
  %225 = vmatpush1.bf16.msra.mxu0 %v192
  %226 = vmatprep.subr.bf16.mxu0 %v195
  %227 = vmatpush1.bf16.msra.mxu0 %v194
  %228 = vmatprep.subr.bf16.mxu0 0
  %229 = vmatpush1.bf16.msra.mxu0 0
  %230 = vmatprep.subr.bf16.mxu0 0
  %231 = vmatpush1.bf16.msra.mxu0 0
  %232 = vmatprep.subr.bf16.mxu0 0
  %233 = vmatpush1.bf16.msra.mxu0 0
  %234 = vmatprep.subr.bf16.mxu0 0
  %235 = vmatpush1.bf16.msra.mxu0 0
  %236 = vmatprep.subr.bf16.mxu0 0
  %237 = vmatpush1.bf16.msra.mxu0 0
  %238 = vmatprep.subr.bf16.mxu0 0
  %239 = vmatpush1.bf16.msra.mxu0 0
  %240 = vmatprep.subr.bf16.mxu0 0
  %241 = vmatpush1.bf16.msra.mxu0 0
  %242 = vmatprep.subr.bf16.mxu0 0
  %243 = vmatpush1.bf16.msra.mxu0 0
  %244 = vmatprep.mubr.bf16.mxu0 0
  %245 = vmatmul.mubr.bf16.gmra.mrb[0].mxu0 %v103
  %v246 = vpop.f32.mrb[0].mxu0
  %v247 = vadd.f32 %v125, %v246
  %v248 = vpop.f32.mrb[0].mxu0
  %v249 = vadd.f32 %v129, %v248
  %v250 = vpop.f32.mrb[0].mxu0
  %v251 = vpop.f32.mrb[0].mxu0
  %252 = vdwg.mxu0
  %v253 = vmax.f32 %v247, 0.0
  %v254 = vmax.f32 %v249, 0.0
  %v255 = vpack.c.bf16 %v253, %v253
  %v256 = vpack.c.bf16 %v254, %v254
  %v257 = vld [vmem:[%s5] sm:$0xff]
  %v258 = vld [vmem:[%s5 + $0x8] sm:$0xff]
  %v259 = vld [vmem:[%s5 + $0x10] sm:$0xff]
  %v260 = vld [vmem:[%s5 + $0x18] sm:$0xff]
  %v261 = vld [vmem:[%s5 + $0x20] sm:$0xff]
  %v262 = vld [vmem:[%s5 + $0x28] sm:$0xff]
  %v263 = vld [vmem:[%s5 + $0x30] sm:$0xff]
  %v264 = vld [vmem:[%s5 + $0x38] sm:$0xff]
  %v265 = vld [vmem:[%s5 + $0x40] sm:$0xff]
  %v266 = vld [vmem:[%s5 + $0x48] sm:$0xff]
  %v267 = vld [vmem:[%s5 + $0x50] sm:$0xff]
  %v268 = vld [vmem:[%s5 + $0x58] sm:$0xff]
  %v269 = vld [vmem:[%s5 + $0x60] sm:$0xff]
  %v270 = vld [vmem:[%s5 + $0x68] sm:$0xff]
  %v271 = vld [vmem:[%s5 + $0x70] sm:$0xff]
  %v272 = vld [vmem:[%s5 + $0x78] sm:$0xff]
  %v273 = vld [vmem:[%s5 + $0x80] sm:$0xff]
  %v274 = vld [vmem:[%s5 + $0x88] sm:$0xff]
  %v275 = vld [vmem:[%s5 + $0x90] sm:$0xff]
  %v276 = vld [vmem:[%s5 + $0x98] sm:$0xff]
  %v277 = vld [vmem:[%s5 + $0xa0] sm:$0xff]
  %v278 = vld [vmem:[%s5 + $0xa8] sm:$0xff]
  %v279 = vld [vmem:[%s5 + $0xb0] sm:$0xff]
  %v280 = vld [vmem:[%s5 + $0xb8] sm:$0xff]
  %v281 = vld [vmem:[%s5 + $0xc0] sm:$0xff]
  %v282 = vld [vmem:[%s5 + $0xc8] sm:$0xff]
  %v283 = vld [vmem:[%s5 + $0xd0] sm:$0xff]
  %v284 = vld [vmem:[%s5 + $0xd8] sm:$0xff]
  %v285 = vld [vmem:[%s5 + $0xe0] sm:$0xff]
  %v286 = vld [vmem:[%s5 + $0xe8] sm:$0xff]
  %v287 = vld [vmem:[%s5 + $0xf0] sm:$0xff]
  %v288 = vld [vmem:[%s5 + $0xf8] sm:$0xff]
  %v289 = vld [vmem:[%s5 + $0x100] sm:$0xff]
  %v290 = vld [vmem:[%s5 + $0x108] sm:$0xff]
  %v291 = vld [vmem:[%s5 + $0x110] sm:$0xff]
  %v292 = vld [vmem:[%s5 + $0x118] sm:$0xff]
  %v293 = vld [vmem:[%s5 + $0x120] sm:$0xff]
  %v294 = vld [vmem:[%s5 + $0x128] sm:$0xff]
  %v295 = vld [vmem:[%s5 + $0x130] sm:$0xff]
  %v296 = vld [vmem:[%s5 + $0x138] sm:$0xff]
  %v297 = vld [vmem:[%s5 + $0x140] sm:$0xff]
  %v298 = vld [vmem:[%s5 + $0x148] sm:$0xff]
  %v299 = vld [vmem:[%s5 + $0x150] sm:$0xff]
  %v300 = vld [vmem:[%s5 + $0x158] sm:$0xff]
  %v301 = vld [vmem:[%s5 + $0x160] sm:$0xff]
  %v302 = vld [vmem:[%s5 + $0x168] sm:$0xff]
  %v303 = vld [vmem:[%s5 + $0x170] sm:$0xff]
  %v304 = vld [vmem:[%s5 + $0x178] sm:$0xff]
  %v305 = vld [vmem:[%s5 + $0x180] sm:$0xff]
  %v306 = vld [vmem:[%s5 + $0x188] sm:$0xff]
  %v307 = vld [vmem:[%s5 + $0x190] sm:$0xff]
  %v308 = vld [vmem:[%s5 + $0x198] sm:$0xff]
  %v309 = vld [vmem:[%s5 + $0x1a0] sm:$0xff]
  %v310 = vld [vmem:[%s5 + $0x1a8] sm:$0xff]
  %v311 = vld [vmem:[%s5 + $0x1b0] sm:$0xff]
  %v312 = vld [vmem:[%s5 + $0x1b8] sm:$0xff]
  %v313 = vld [vmem:[%s5 + $0x1c0] sm:$0xff]
  %v314 = vld [vmem:[%s5 + $0x1c8] sm:$0xff]
  %v315 = vld [vmem:[%s5 + $0x1d0] sm:$0xff]
  %v316 = vld [vmem:[%s5 + $0x1d8] sm:$0xff]
  %v317 = vld [vmem:[%s5 + $0x1e0] sm:$0xff]
  %v318 = vld [vmem:[%s5 + $0x1e8] sm:$0xff]
  %v319 = vld [vmem:[%s5 + $0x1f0] sm:$0xff]
  %v320 = vld [vmem:[%s5 + $0x1f8] sm:$0xff]
  %v321 = vld [vmem:[%s6] sm:$0xf]
  %v323 = vlaneseq
  %v324 = vshrl.u32 %v323, 7
  %v325 = vsub.s32 0, %v324
  %v326 = vrot.slane %v321, %v325
  %v327 = vlaneseq
  %v328 = vshrl.u32 %v327, 7
  %v329 = vsub.s32 1, %v328
  %v330 = vrot.slane %v321, %v329
  %v331 = vlaneseq
  %v332 = vshrl.u32 %v331, 7
  %v333 = vsub.s32 2, %v332
  %v334 = vrot.slane %v321, %v333
  %v335 = vlaneseq
  %v336 = vshrl.u32 %v335, 7
  %v337 = vsub.s32 3, %v336
  %v338 = vrot.slane %v321, %v337
  %v407 = vunpack.c.l.b16 %v257
  %v408 = vunpack.c.h.b16 %v257
  %v409 = vunpack.c.l.b16 %v258
  %v410 = vunpack.c.h.b16 %v258
  %v411 = vunpack.c.l.b16 %v259
  %v412 = vunpack.c.h.b16 %v259
  %v413 = vunpack.c.l.b16 %v260
  %v414 = vunpack.c.h.b16 %v260
  %v415 = vunpack.c.l.b16 %v261
  %v416 = vunpack.c.h.b16 %v261
  %v417 = vunpack.c.l.b16 %v262
  %v418 = vunpack.c.h.b16 %v262
  %v419 = vunpack.c.l.b16 %v263
  %v420 = vunpack.c.h.b16 %v263
  %v421 = vunpack.c.l.b16 %v264
  %v422 = vunpack.c.h.b16 %v264
  %v423 = vunpack.c.l.b16 %v265
  %v424 = vunpack.c.h.b16 %v265
  %v425 = vunpack.c.l.b16 %v266
  %v426 = vunpack.c.h.b16 %v266
  %v427 = vunpack.c.l.b16 %v267
  %v428 = vunpack.c.h.b16 %v267
  %v429 = vunpack.c.l.b16 %v268
  %v430 = vunpack.c.h.b16 %v268
  %v431 = vunpack.c.l.b16 %v269
  %v432 = vunpack.c.h.b16 %v269
  %v433 = vunpack.c.l.b16 %v270
  %v434 = vunpack.c.h.b16 %v270
  %v435 = vunpack.c.l.b16 %v271
  %v436 = vunpack.c.h.b16 %v271
  %v437 = vunpack.c.l.b16 %v272
  %v438 = vunpack.c.h.b16 %v272
  %v439 = vunpack.c.l.b16 %v273
  %v440 = vunpack.c.h.b16 %v273
  %v441 = vunpack.c.l.b16 %v274
  %v442 = vunpack.c.h.b16 %v274
  %v443 = vunpack.c.l.b16 %v275
  %v444 = vunpack.c.h.b16 %v275
  %v445 = vunpack.c.l.b16 %v276
  %v446 = vunpack.c.h.b16 %v276
  %v447 = vunpack.c.l.b16 %v277
  %v448 = vunpack.c.h.b16 %v277
  %v449 = vunpack.c.l.b16 %v278
  %v450 = vunpack.c.h.b16 %v278
  %v451 = vunpack.c.l.b16 %v279
  %v452 = vunpack.c.h.b16 %v279
  %v453 = vunpack.c.l.b16 %v280
  %v454 = vunpack.c.h.b16 %v280
  %v455 = vunpack.c.l.b16 %v281
  %v456 = vunpack.c.h.b16 %v281
  %v457 = vunpack.c.l.b16 %v282
  %v458 = vunpack.c.h.b16 %v282
  %v459 = vunpack.c.l.b16 %v283
  %v460 = vunpack.c.h.b16 %v283
  %v461 = vunpack.c.l.b16 %v284
  %v462 = vunpack.c.h.b16 %v284
  %v463 = vunpack.c.l.b16 %v285
  %v464 = vunpack.c.h.b16 %v285
  %v465 = vunpack.c.l.b16 %v286
  %v466 = vunpack.c.h.b16 %v286
  %v467 = vunpack.c.l.b16 %v287
  %v468 = vunpack.c.h.b16 %v287
  %v469 = vunpack.c.l.b16 %v288
  %v470 = vunpack.c.h.b16 %v288
  %v471 = vunpack.c.l.b16 %v289
  %v472 = vunpack.c.h.b16 %v289
  %v473 = vunpack.c.l.b16 %v290
  %v474 = vunpack.c.h.b16 %v290
  %v475 = vunpack.c.l.b16 %v291
  %v476 = vunpack.c.h.b16 %v291
  %v477 = vunpack.c.l.b16 %v292
  %v478 = vunpack.c.h.b16 %v292
  %v479 = vunpack.c.l.b16 %v293
  %v480 = vunpack.c.h.b16 %v293
  %v481 = vunpack.c.l.b16 %v294
  %v482 = vunpack.c.h.b16 %v294
  %v483 = vunpack.c.l.b16 %v295
  %v484 = vunpack.c.h.b16 %v295
  %v485 = vunpack.c.l.b16 %v296
  %v486 = vunpack.c.h.b16 %v296
  %v487 = vunpack.c.l.b16 %v297
  %v488 = vunpack.c.h.b16 %v297
  %v489 = vunpack.c.l.b16 %v298
  %v490 = vunpack.c.h.b16 %v298
  %v491 = vunpack.c.l.b16 %v299
  %v492 = vunpack.c.h.b16 %v299
  %v493 = vunpack.c.l.b16 %v300
  %v494 = vunpack.c.h.b16 %v300
  %v495 = vunpack.c.l.b16 %v301
  %v496 = vunpack.c.h.b16 %v301
  %v497 = vunpack.c.l.b16 %v302
  %v498 = vunpack.c.h.b16 %v302
  %v499 = vunpack.c.l.b16 %v303
  %v500 = vunpack.c.h.b16 %v303
  %v501 = vunpack.c.l.b16 %v304
  %v502 = vunpack.c.h.b16 %v304
  %v503 = vunpack.c.l.b16 %v305
  %v504 = vunpack.c.h.b16 %v305
  %v505 = vunpack.c.l.b16 %v306
  %v506 = vunpack.c.h.b16 %v306
  %v507 = vunpack.c.l.b16 %v307
  %v508 = vunpack.c.h.b16 %v307
  %v509 = vunpack.c.l.b16 %v308
  %v510 = vunpack.c.h.b16 %v308
  %v511 = vunpack.c.l.b16 %v309
  %v512 = vunpack.c.h.b16 %v309
  %v513 = vunpack.c.l.b16 %v310
  %v514 = vunpack.c.h.b16 %v310
  %v515 = vunpack.c.l.b16 %v311
  %v516 = vunpack.c.h.b16 %v311
  %v517 = vunpack.c.l.b16 %v312
  %v518 = vunpack.c.h.b16 %v312
  %v519 = vunpack.c.l.b16 %v313
  %v520 = vunpack.c.h.b16 %v313
  %v521 = vunpack.c.l.b16 %v314
  %v522 = vunpack.c.h.b16 %v314
  %v523 = vunpack.c.l.b16 %v315
  %v524 = vunpack.c.h.b16 %v315
  %v525 = vunpack.c.l.b16 %v316
  %v526 = vunpack.c.h.b16 %v316
  %v527 = vunpack.c.l.b16 %v317
  %v528 = vunpack.c.h.b16 %v317
  %v529 = vunpack.c.l.b16 %v318
  %v530 = vunpack.c.h.b16 %v318
  %v531 = vunpack.c.l.b16 %v319
  %v532 = vunpack.c.h.b16 %v319
  %v533 = vunpack.c.l.b16 %v320
  %v534 = vunpack.c.h.b16 %v320
  %v535 = vpack.c.b16 %v411, %v407
  %v536 = vpack.c.b16 %v412, %v408
  %v537 = vpack.c.b16 %v413, %v409
  %v538 = vpack.c.b16 %v414, %v410
  %v539 = vpack.c.b16 %v419, %v415
  %v540 = vpack.c.b16 %v420, %v416
  %v541 = vpack.c.b16 %v421, %v417
  %v542 = vpack.c.b16 %v422, %v418
  %v543 = vpack.c.b16 %v427, %v423
  %v544 = vpack.c.b16 %v428, %v424
  %v545 = vpack.c.b16 %v429, %v425
  %v546 = vpack.c.b16 %v430, %v426
  %v547 = vpack.c.b16 %v435, %v431
  %v548 = vpack.c.b16 %v436, %v432
  %v549 = vpack.c.b16 %v437, %v433
  %v550 = vpack.c.b16 %v438, %v434
  %v551 = vpack.c.b16 %v443, %v439
  %v552 = vpack.c.b16 %v444, %v440
  %v553 = vpack.c.b16 %v445, %v441
  %v554 = vpack.c.b16 %v446, %v442
  %v555 = vpack.c.b16 %v451, %v447
  %v556 = vpack.c.b16 %v452, %v448
  %v557 = vpack.c.b16 %v453, %v449
  %v558 = vpack.c.b16 %v454, %v450
  %v559 = vpack.c.b16 %v459, %v455
  %v560 = vpack.c.b16 %v460, %v456
  %v561 = vpack.c.b16 %v461, %v457
  %v562 = vpack.c.b16 %v462, %v458
  %v563 = vpack.c.b16 %v467, %v463
  %v564 = vpack.c.b16 %v468, %v464
  %v565 = vpack.c.b16 %v469, %v465
  %v566 = vpack.c.b16 %v470, %v466
  %v567 = vpack.c.b16 %v475, %v471
  %v568 = vpack.c.b16 %v476, %v472
  %v569 = vpack.c.b16 %v477, %v473
  %v570 = vpack.c.b16 %v478, %v474
  %v571 = vpack.c.b16 %v483, %v479
  %v572 = vpack.c.b16 %v484, %v480
  %v573 = vpack.c.b16 %v485, %v481
  %v574 = vpack.c.b16 %v486, %v482
  %v575 = vpack.c.b16 %v491, %v487
  %v576 = vpack.c.b16 %v492, %v488
  %v577 = vpack.c.b16 %v493, %v489
  %v578 = vpack.c.b16 %v494, %v490
  %v579 = vpack.c.b16 %v499, %v495
  %v580 = vpack.c.b16 %v500, %v496
  %v581 = vpack.c.b16 %v501, %v497
  %v582 = vpack.c.b16 %v502, %v498
  %v583 = vpack.c.b16 %v507, %v503
  %v584 = vpack.c.b16 %v508, %v504
  %v585 = vpack.c.b16 %v509, %v505
  %v586 = vpack.c.b16 %v510, %v506
  %v587 = vpack.c.b16 %v515, %v511
  %v588 = vpack.c.b16 %v516, %v512
  %v589 = vpack.c.b16 %v517, %v513
  %v590 = vpack.c.b16 %v518, %v514
  %v591 = vpack.c.b16 %v523, %v519
  %v592 = vpack.c.b16 %v524, %v520
  %v593 = vpack.c.b16 %v525, %v521
  %v594 = vpack.c.b16 %v526, %v522
  %v595 = vpack.c.b16 %v531, %v527
  %v596 = vpack.c.b16 %v532, %v528
  %v597 = vpack.c.b16 %v533, %v529
  %v598 = vpack.c.b16 %v534, %v530
  %663 = vmatprep.subr.bf16.mxu0 %v536
  %664 = vmatpush1.bf16.msra.mxu0 %v535
  %665 = vmatprep.subr.bf16.mxu0 %v540
  %666 = vmatpush1.bf16.msra.mxu0 %v539
  %667 = vmatprep.subr.bf16.mxu0 %v544
  %668 = vmatpush1.bf16.msra.mxu0 %v543
  %669 = vmatprep.subr.bf16.mxu0 %v548
  %670 = vmatpush1.bf16.msra.mxu0 %v547
  %671 = vmatprep.subr.bf16.mxu0 %v552
  %672 = vmatpush1.bf16.msra.mxu0 %v551
  %673 = vmatprep.subr.bf16.mxu0 %v556
  %674 = vmatpush1.bf16.msra.mxu0 %v555
  %675 = vmatprep.subr.bf16.mxu0 %v560
  %676 = vmatpush1.bf16.msra.mxu0 %v559
  %677 = vmatprep.subr.bf16.mxu0 %v564
  %678 = vmatpush1.bf16.msra.mxu0 %v563
  %679 = vmatprep.subr.bf16.mxu0 %v568
  %680 = vmatpush1.bf16.msra.mxu0 %v567
  %681 = vmatprep.subr.bf16.mxu0 %v572
  %682 = vmatpush1.bf16.msra.mxu0 %v571
  %683 = vmatprep.subr.bf16.mxu0 %v576
  %684 = vmatpush1.bf16.msra.mxu0 %v575
  %685 = vmatprep.subr.bf16.mxu0 %v580
  %686 = vmatpush1.bf16.msra.mxu0 %v579
  %687 = vmatprep.subr.bf16.mxu0 %v584
  %688 = vmatpush1.bf16.msra.mxu0 %v583
  %689 = vmatprep.subr.bf16.mxu0 %v588
  %690 = vmatpush1.bf16.msra.mxu0 %v587
  %691 = vmatprep.subr.bf16.mxu0 %v592
  %692 = vmatpush1.bf16.msra.mxu0 %v591
  %693 = vmatprep.subr.bf16.mxu0 %v596
  %694 = vmatpush1.bf16.msra.mxu0 %v595
  %695 = vmatprep.mubr.bf16.mxu0 %v256
  %696 = vmatmul.mubr.bf16.gmra.mrb[0].mxu0 %v255
  %v697 = vpop.f32.mrb[0].mxu0
  %v698 = vadd.f32 %v326, %v697
  %v699 = vpop.f32.mrb[0].mxu0
  %v700 = vadd.f32 %v330, %v699
  %v701 = vpop.f32.mrb[0].mxu0
  %v702 = vpop.f32.mrb[0].mxu0
  %703 = vdwg.mxu0
  %704 = vmatprep.subr.bf16.mxu0 %v538
  %705 = vmatpush1.bf16.msra.mxu0 %v537
  %706 = vmatprep.subr.bf16.mxu0 %v542
  %707 = vmatpush1.bf16.msra.mxu0 %v541
  %708 = vmatprep.subr.bf16.mxu0 %v546
  %709 = vmatpush1.bf16.msra.mxu0 %v545
  %710 = vmatprep.subr.bf16.mxu0 %v550
  %711 = vmatpush1.bf16.msra.mxu0 %v549
  %712 = vmatprep.subr.bf16.mxu0 %v554
  %713 = vmatpush1.bf16.msra.mxu0 %v553
  %714 = vmatprep.subr.bf16.mxu0 %v558
  %715 = vmatpush1.bf16.msra.mxu0 %v557
  %716 = vmatprep.subr.bf16.mxu0 %v562
  %717 = vmatpush1.bf16.msra.mxu0 %v561
  %718 = vmatprep.subr.bf16.mxu0 %v566
  %719 = vmatpush1.bf16.msra.mxu0 %v565
  %720 = vmatprep.subr.bf16.mxu0 %v570
  %721 = vmatpush1.bf16.msra.mxu0 %v569
  %722 = vmatprep.subr.bf16.mxu0 %v574
  %723 = vmatpush1.bf16.msra.mxu0 %v573
  %724 = vmatprep.subr.bf16.mxu0 %v578
  %725 = vmatpush1.bf16.msra.mxu0 %v577
  %726 = vmatprep.subr.bf16.mxu0 %v582
  %727 = vmatpush1.bf16.msra.mxu0 %v581
  %728 = vmatprep.subr.bf16.mxu0 %v586
  %729 = vmatpush1.bf16.msra.mxu0 %v585
  %730 = vmatprep.subr.bf16.mxu0 %v590
  %731 = vmatpush1.bf16.msra.mxu0 %v589
  %732 = vmatprep.subr.bf16.mxu0 %v594
  %733 = vmatpush1.bf16.msra.mxu0 %v593
  %734 = vmatprep.subr.bf16.mxu0 %v598
  %735 = vmatpush1.bf16.msra.mxu0 %v597
  %736 = vmatprep.mubr.bf16.mxu0 %v256
  %737 = vmatmul.mubr.bf16.gmra.mrb[0].mxu0 %v255
  %v738 = vpop.f32.mrb[0].mxu0
  %v739 = vadd.f32 %v334, %v738
  %v740 = vpop.f32.mrb[0].mxu0
  %v741 = vadd.f32 %v338, %v740
  %v742 = vpop.f32.mrb[0].mxu0
  %v743 = vpop.f32.mrb[0].mxu0
  %744 = vdwg.mxu0
  %v745 = vmax.f32 %v698, 0.0
  %v746 = vmax.f32 %v700, 0.0
  %v747 = vmax.f32 %v739, 0.0
  %v748 = vmax.f32 %v741, 0.0
  %v749 = vpack.c.bf16 %v745, %v745
  %v750 = vpack.c.bf16 %v746, %v746
  %v751 = vpack.c.bf16 %v747, %v747
  %v752 = vpack.c.bf16 %v748, %v748
  %v753 = vld [vmem:[%s7] sm:$0xff]
  %v754 = vld [vmem:[%s7 + $0x8] sm:$0xff]
  %v755 = vld [vmem:[%s7 + $0x10] sm:$0xff]
  %v756 = vld [vmem:[%s7 + $0x18] sm:$0xff]
  %v757 = vld [vmem:[%s7 + $0x20] sm:$0xff]
  %v758 = vld [vmem:[%s7 + $0x28] sm:$0xff]
  %v759 = vld [vmem:[%s7 + $0x30] sm:$0xff]
  %v760 = vld [vmem:[%s7 + $0x38] sm:$0xff]
  %v761 = vld [vmem:[%s7 + $0x40] sm:$0xff]
  %v762 = vld [vmem:[%s7 + $0x48] sm:$0xff]
  %v763 = vld [vmem:[%s7 + $0x50] sm:$0xff]
  %v764 = vld [vmem:[%s7 + $0x58] sm:$0xff]
  %v765 = vld [vmem:[%s7 + $0x60] sm:$0xff]
  %v766 = vld [vmem:[%s7 + $0x68] sm:$0xff]
  %v767 = vld [vmem:[%s7 + $0x70] sm:$0xff]
  %v768 = vld [vmem:[%s7 + $0x78] sm:$0xff]
  %v769 = vld [vmem:[%s7 + $0x80] sm:$0xff]
  %v770 = vld [vmem:[%s7 + $0x88] sm:$0xff]
  %v771 = vld [vmem:[%s7 + $0x90] sm:$0xff]
  %v772 = vld [vmem:[%s7 + $0x98] sm:$0xff]
  %v773 = vld [vmem:[%s7 + $0xa0] sm:$0xff]
  %v774 = vld [vmem:[%s7 + $0xa8] sm:$0xff]
  %v775 = vld [vmem:[%s7 + $0xb0] sm:$0xff]
  %v776 = vld [vmem:[%s7 + $0xb8] sm:$0xff]
  %v777 = vld [vmem:[%s7 + $0xc0] sm:$0xff]
  %v778 = vld [vmem:[%s7 + $0xc8] sm:$0xff]
  %v779 = vld [vmem:[%s7 + $0xd0] sm:$0xff]
  %v780 = vld [vmem:[%s7 + $0xd8] sm:$0xff]
  %v781 = vld [vmem:[%s7 + $0xe0] sm:$0xff]
  %v782 = vld [vmem:[%s7 + $0xe8] sm:$0xff]
  %v783 = vld [vmem:[%s7 + $0xf0] sm:$0xff]
  %v784 = vld [vmem:[%s7 + $0xf8] sm:$0xff]
  %v785 = vld [vmem:[%s7 + $0x100] sm:$0xff]
  %v786 = vld [vmem:[%s7 + $0x108] sm:$0xff]
  %v787 = vld [vmem:[%s7 + $0x110] sm:$0xff]
  %v788 = vld [vmem:[%s7 + $0x118] sm:$0xff]
  %v789 = vld [vmem:[%s7 + $0x120] sm:$0xff]
  %v790 = vld [vmem:[%s7 + $0x128] sm:$0xff]
  %v791 = vld [vmem:[%s7 + $0x130] sm:$0xff]
  %v792 = vld [vmem:[%s7 + $0x138] sm:$0xff]
  %v793 = vld [vmem:[%s7 + $0x140] sm:$0xff]
  %v794 = vld [vmem:[%s7 + $0x148] sm:$0xff]
  %v795 = vld [vmem:[%s7 + $0x150] sm:$0xff]
  %v796 = vld [vmem:[%s7 + $0x158] sm:$0xff]
  %v797 = vld [vmem:[%s7 + $0x160] sm:$0xff]
  %v798 = vld [vmem:[%s7 + $0x168] sm:$0xff]
  %v799 = vld [vmem:[%s7 + $0x170] sm:$0xff]
  %v800 = vld [vmem:[%s7 + $0x178] sm:$0xff]
  %v801 = vld [vmem:[%s7 + $0x180] sm:$0xff]
  %v802 = vld [vmem:[%s7 + $0x188] sm:$0xff]
  %v803 = vld [vmem:[%s7 + $0x190] sm:$0xff]
  %v804 = vld [vmem:[%s7 + $0x198] sm:$0xff]
  %v805 = vld [vmem:[%s7 + $0x1a0] sm:$0xff]
  %v806 = vld [vmem:[%s7 + $0x1a8] sm:$0xff]
  %v807 = vld [vmem:[%s7 + $0x1b0] sm:$0xff]
  %v808 = vld [vmem:[%s7 + $0x1b8] sm:$0xff]
  %v809 = vld [vmem:[%s7 + $0x1c0] sm:$0xff]
  %v810 = vld [vmem:[%s7 + $0x1c8] sm:$0xff]
  %v811 = vld [vmem:[%s7 + $0x1d0] sm:$0xff]
  %v812 = vld [vmem:[%s7 + $0x1d8] sm:$0xff]
  %v813 = vld [vmem:[%s7 + $0x1e0] sm:$0xff]
  %v814 = vld [vmem:[%s7 + $0x1e8] sm:$0xff]
  %v815 = vld [vmem:[%s7 + $0x1f0] sm:$0xff]
  %v816 = vld [vmem:[%s7 + $0x1f8] sm:$0xff]
  %v817 = vld [vmem:[%s7 + $0x200] sm:$0xff]
  %v818 = vld [vmem:[%s7 + $0x208] sm:$0xff]
  %v819 = vld [vmem:[%s7 + $0x210] sm:$0xff]
  %v820 = vld [vmem:[%s7 + $0x218] sm:$0xff]
  %v821 = vld [vmem:[%s7 + $0x220] sm:$0xff]
  %v822 = vld [vmem:[%s7 + $0x228] sm:$0xff]
  %v823 = vld [vmem:[%s7 + $0x230] sm:$0xff]
  %v824 = vld [vmem:[%s7 + $0x238] sm:$0xff]
  %v825 = vld [vmem:[%s7 + $0x240] sm:$0xff]
  %v826 = vld [vmem:[%s7 + $0x248] sm:$0xff]
  %v827 = vld [vmem:[%s7 + $0x250] sm:$0xff]
  %v828 = vld [vmem:[%s7 + $0x258] sm:$0xff]
  %v829 = vld [vmem:[%s7 + $0x260] sm:$0xff]
  %v830 = vld [vmem:[%s7 + $0x268] sm:$0xff]
  %v831 = vld [vmem:[%s7 + $0x270] sm:$0xff]
  %v832 = vld [vmem:[%s7 + $0x278] sm:$0xff]
  %v833 = vld [vmem:[%s7 + $0x280] sm:$0xff]
  %v834 = vld [vmem:[%s7 + $0x288] sm:$0xff]
  %v835 = vld [vmem:[%s7 + $0x290] sm:$0xff]
  %v836 = vld [vmem:[%s7 + $0x298] sm:$0xff]
  %v837 = vld [vmem:[%s7 + $0x2a0] sm:$0xff]
  %v838 = vld [vmem:[%s7 + $0x2a8] sm:$0xff]
  %v839 = vld [vmem:[%s7 + $0x2b0] sm:$0xff]
  %v840 = vld [vmem:[%s7 + $0x2b8] sm:$0xff]
  %v841 = vld [vmem:[%s7 + $0x2c0] sm:$0xff]
  %v842 = vld [vmem:[%s7 + $0x2c8] sm:$0xff]
  %v843 = vld [vmem:[%s7 + $0x2d0] sm:$0xff]
  %v844 = vld [vmem:[%s7 + $0x2d8] sm:$0xff]
  %v845 = vld [vmem:[%s7 + $0x2e0] sm:$0xff]
  %v846 = vld [vmem:[%s7 + $0x2e8] sm:$0xff]
  %v847 = vld [vmem:[%s7 + $0x2f0] sm:$0xff]
  %v848 = vld [vmem:[%s7 + $0x2f8] sm:$0xff]
  %v849 = vld [vmem:[%s7 + $0x300] sm:$0xff]
  %v850 = vld [vmem:[%s7 + $0x308] sm:$0xff]
  %v851 = vld [vmem:[%s7 + $0x310] sm:$0xff]
  %v852 = vld [vmem:[%s7 + $0x318] sm:$0xff]
  %v853 = vld [vmem:[%s7 + $0x320] sm:$0xff]
  %v854 = vld [vmem:[%s7 + $0x328] sm:$0xff]
  %v855 = vld [vmem:[%s7 + $0x330] sm:$0xff]
  %v856 = vld [vmem:[%s7 + $0x338] sm:$0xff]
  %v857 = vld [vmem:[%s7 + $0x340] sm:$0xff]
  %v858 = vld [vmem:[%s7 + $0x348] sm:$0xff]
  %v859 = vld [vmem:[%s7 + $0x350] sm:$0xff]
  %v860 = vld [vmem:[%s7 + $0x358] sm:$0xff]
  %v861 = vld [vmem:[%s7 + $0x360] sm:$0xff]
  %v862 = vld [vmem:[%s7 + $0x368] sm:$0xff]
  %v863 = vld [vmem:[%s7 + $0x370] sm:$0xff]
  %v864 = vld [vmem:[%s7 + $0x378] sm:$0xff]
  %v865 = vld [vmem:[%s7 + $0x380] sm:$0xff]
  %v866 = vld [vmem:[%s7 + $0x388] sm:$0xff]
  %v867 = vld [vmem:[%s7 + $0x390] sm:$0xff]
  %v868 = vld [vmem:[%s7 + $0x398] sm:$0xff]
  %v869 = vld [vmem:[%s7 + $0x3a0] sm:$0xff]
  %v870 = vld [vmem:[%s7 + $0x3a8] sm:$0xff]
  %v871 = vld [vmem:[%s7 + $0x3b0] sm:$0xff]
  %v872 = vld [vmem:[%s7 + $0x3b8] sm:$0xff]
  %v873 = vld [vmem:[%s7 + $0x3c0] sm:$0xff]
  %v874 = vld [vmem:[%s7 + $0x3c8] sm:$0xff]
  %v875 = vld [vmem:[%s7 + $0x3d0] sm:$0xff]
  %v876 = vld [vmem:[%s7 + $0x3d8] sm:$0xff]
  %v877 = vld [vmem:[%s7 + $0x3e0] sm:$0xff]
  %v878 = vld [vmem:[%s7 + $0x3e8] sm:$0xff]
  %v879 = vld [vmem:[%s7 + $0x3f0] sm:$0xff]
  %v880 = vld [vmem:[%s7 + $0x3f8] sm:$0xff]
  %v881 = vld [vmem:[%s7 + $0x400] sm:$0xff]
  %v882 = vld [vmem:[%s7 + $0x408] sm:$0xff]
  %v883 = vld [vmem:[%s7 + $0x410] sm:$0xff]
  %v884 = vld [vmem:[%s7 + $0x418] sm:$0xff]
  %v885 = vld [vmem:[%s7 + $0x420] sm:$0xff]
  %v886 = vld [vmem:[%s7 + $0x428] sm:$0xff]
  %v887 = vld [vmem:[%s7 + $0x430] sm:$0xff]
  %v888 = vld [vmem:[%s7 + $0x438] sm:$0xff]
  %v889 = vld [vmem:[%s7 + $0x440] sm:$0xff]
  %v890 = vld [vmem:[%s7 + $0x448] sm:$0xff]
  %v891 = vld [vmem:[%s7 + $0x450] sm:$0xff]
  %v892 = vld [vmem:[%s7 + $0x458] sm:$0xff]
  %v893 = vld [vmem:[%s7 + $0x460] sm:$0xff]
  %v894 = vld [vmem:[%s7 + $0x468] sm:$0xff]
  %v895 = vld [vmem:[%s7 + $0x470] sm:$0xff]
  %v896 = vld [vmem:[%s7 + $0x478] sm:$0xff]
  %v897 = vld [vmem:[%s7 + $0x480] sm:$0xff]
  %v898 = vld [vmem:[%s7 + $0x488] sm:$0xff]
  %v899 = vld [vmem:[%s7 + $0x490] sm:$0xff]
  %v900 = vld [vmem:[%s7 + $0x498] sm:$0xff]
  %v901 = vld [vmem:[%s7 + $0x4a0] sm:$0xff]
  %v902 = vld [vmem:[%s7 + $0x4a8] sm:$0xff]
  %v903 = vld [vmem:[%s7 + $0x4b0] sm:$0xff]
  %v904 = vld [vmem:[%s7 + $0x4b8] sm:$0xff]
  %v905 = vld [vmem:[%s7 + $0x4c0] sm:$0xff]
  %v906 = vld [vmem:[%s7 + $0x4c8] sm:$0xff]
  %v907 = vld [vmem:[%s7 + $0x4d0] sm:$0xff]
  %v908 = vld [vmem:[%s7 + $0x4d8] sm:$0xff]
  %v909 = vld [vmem:[%s7 + $0x4e0] sm:$0xff]
  %v910 = vld [vmem:[%s7 + $0x4e8] sm:$0xff]
  %v911 = vld [vmem:[%s7 + $0x4f0] sm:$0xff]
  %v912 = vld [vmem:[%s7 + $0x4f8] sm:$0xff]
  %v913 = vld [vmem:[%s7 + $0x500] sm:$0xff]
  %v914 = vld [vmem:[%s7 + $0x508] sm:$0xff]
  %v915 = vld [vmem:[%s7 + $0x510] sm:$0xff]
  %v916 = vld [vmem:[%s7 + $0x518] sm:$0xff]
  %v917 = vld [vmem:[%s7 + $0x520] sm:$0xff]
  %v918 = vld [vmem:[%s7 + $0x528] sm:$0xff]
  %v919 = vld [vmem:[%s7 + $0x530] sm:$0xff]
  %v920 = vld [vmem:[%s7 + $0x538] sm:$0xff]
  %v921 = vld [vmem:[%s7 + $0x540] sm:$0xff]
  %v922 = vld [vmem:[%s7 + $0x548] sm:$0xff]
  %v923 = vld [vmem:[%s7 + $0x550] sm:$0xff]
  %v924 = vld [vmem:[%s7 + $0x558] sm:$0xff]
  %v925 = vld [vmem:[%s7 + $0x560] sm:$0xff]
  %v926 = vld [vmem:[%s7 + $0x568] sm:$0xff]
  %v927 = vld [vmem:[%s7 + $0x570] sm:$0xff]
  %v928 = vld [vmem:[%s7 + $0x578] sm:$0xff]
  %v929 = vld [vmem:[%s7 + $0x580] sm:$0xff]
  %v930 = vld [vmem:[%s7 + $0x588] sm:$0xff]
  %v931 = vld [vmem:[%s7 + $0x590] sm:$0xff]
  %v932 = vld [vmem:[%s7 + $0x598] sm:$0xff]
  %v933 = vld [vmem:[%s7 + $0x5a0] sm:$0xff]
  %v934 = vld [vmem:[%s7 + $0x5a8] sm:$0xff]
  %v935 = vld [vmem:[%s7 + $0x5b0] sm:$0xff]
  %v936 = vld [vmem:[%s7 + $0x5b8] sm:$0xff]
  %v937 = vld [vmem:[%s7 + $0x5c0] sm:$0xff]
  %v938 = vld [vmem:[%s7 + $0x5c8] sm:$0xff]
  %v939 = vld [vmem:[%s7 + $0x5d0] sm:$0xff]
  %v940 = vld [vmem:[%s7 + $0x5d8] sm:$0xff]
  %v941 = vld [vmem:[%s7 + $0x5e0] sm:$0xff]
  %v942 = vld [vmem:[%s7 + $0x5e8] sm:$0xff]
  %v943 = vld [vmem:[%s7 + $0x5f0] sm:$0xff]
  %v944 = vld [vmem:[%s7 + $0x5f8] sm:$0xff]
  %v945 = vld [vmem:[%s8] sm:$0x3f]
  %v947 = vlaneseq
  %v948 = vshrl.u32 %v947, 7
  %v949 = vsub.s32 0, %v948
  %v950 = vrot.slane %v945, %v949
  %v951 = vlaneseq
  %v952 = vshrl.u32 %v951, 7
  %v953 = vsub.s32 1, %v952
  %v954 = vrot.slane %v945, %v953
  %v955 = vlaneseq
  %v956 = vshrl.u32 %v955, 7
  %v957 = vsub.s32 2, %v956
  %v958 = vrot.slane %v945, %v957
  %v959 = vlaneseq
  %v960 = vshrl.u32 %v959, 7
  %v961 = vsub.s32 3, %v960
  %v962 = vrot.slane %v945, %v961
  %v963 = vlaneseq
  %v964 = vshrl.u32 %v963, 7
  %v965 = vsub.s32 4, %v964
  %v966 = vrot.slane %v945, %v965
  %v967 = vlaneseq
  %v968 = vshrl.u32 %v967, 7
  %v969 = vsub.s32 5, %v968
  %v970 = vrot.slane %v945, %v969
  %v1169 = vunpack.c.l.b16 %v753
  %v1170 = vunpack.c.h.b16 %v753
  %v1171 = vunpack.c.l.b16 %v754
  %v1172 = vunpack.c.h.b16 %v754
  %v1173 = vunpack.c.l.b16 %v755
  %v1174 = vunpack.c.h.b16 %v755
  %v1175 = vunpack.c.l.b16 %v756
  %v1176 = vunpack.c.h.b16 %v756
  %v1177 = vunpack.c.l.b16 %v757
  %v1178 = vunpack.c.h.b16 %v757
  %v1179 = vunpack.c.l.b16 %v758
  %v1180 = vunpack.c.h.b16 %v758
  %v1181 = vunpack.c.l.b16 %v759
  %v1182 = vunpack.c.h.b16 %v759
  %v1183 = vunpack.c.l.b16 %v760
  %v1184 = vunpack.c.h.b16 %v760
  %v1185 = vunpack.c.l.b16 %v761
  %v1186 = vunpack.c.h.b16 %v761
  %v1187 = vunpack.c.l.b16 %v762
  %v1188 = vunpack.c.h.b16 %v762
  %v1189 = vunpack.c.l.b16 %v763
  %v1190 = vunpack.c.h.b16 %v763
  %v1191 = vunpack.c.l.b16 %v764
  %v1192 = vunpack.c.h.b16 %v764
  %v1193 = vunpack.c.l.b16 %v765
  %v1194 = vunpack.c.h.b16 %v765
  %v1195 = vunpack.c.l.b16 %v766
  %v1196 = vunpack.c.h.b16 %v766
  %v1197 = vunpack.c.l.b16 %v767
  %v1198 = vunpack.c.h.b16 %v767
  %v1199 = vunpack.c.l.b16 %v768
  %v1200 = vunpack.c.h.b16 %v768
  %v1201 = vunpack.c.l.b16 %v769
  %v1202 = vunpack.c.h.b16 %v769
  %v1203 = vunpack.c.l.b16 %v770
  %v1204 = vunpack.c.h.b16 %v770
  %v1205 = vunpack.c.l.b16 %v771
  %v1206 = vunpack.c.h.b16 %v771
  %v1207 = vunpack.c.l.b16 %v772
  %v1208 = vunpack.c.h.b16 %v772
  %v1209 = vunpack.c.l.b16 %v773
  %v1210 = vunpack.c.h.b16 %v773
  %v1211 = vunpack.c.l.b16 %v774
  %v1212 = vunpack.c.h.b16 %v774
  %v1213 = vunpack.c.l.b16 %v775
  %v1214 = vunpack.c.h.b16 %v775
  %v1215 = vunpack.c.l.b16 %v776
  %v1216 = vunpack.c.h.b16 %v776
  %v1217 = vunpack.c.l.b16 %v777
  %v1218 = vunpack.c.h.b16 %v777
  %v1219 = vunpack.c.l.b16 %v778
  %v1220 = vunpack.c.h.b16 %v778
  %v1221 = vunpack.c.l.b16 %v779
  %v1222 = vunpack.c.h.b16 %v779
  %v1223 = vunpack.c.l.b16 %v780
  %v1224 = vunpack.c.h.b16 %v780
  %v1225 = vunpack.c.l.b16 %v781
  %v1226 = vunpack.c.h.b16 %v781
  %v1227 = vunpack.c.l.b16 %v782
  %v1228 = vunpack.c.h.b16 %v782
  %v1229 = vunpack.c.l.b16 %v783
  %v1230 = vunpack.c.h.b16 %v783
  %v1231 = vunpack.c.l.b16 %v784
  %v1232 = vunpack.c.h.b16 %v784
  %v1233 = vunpack.c.l.b16 %v785
  %v1234 = vunpack.c.h.b16 %v785
  %v1235 = vunpack.c.l.b16 %v786
  %v1236 = vunpack.c.h.b16 %v786
  %v1237 = vunpack.c.l.b16 %v787
  %v1238 = vunpack.c.h.b16 %v787
  %v1239 = vunpack.c.l.b16 %v788
  %v1240 = vunpack.c.h.b16 %v788
  %v1241 = vunpack.c.l.b16 %v789
  %v1242 = vunpack.c.h.b16 %v789
  %v1243 = vunpack.c.l.b16 %v790
  %v1244 = vunpack.c.h.b16 %v790
  %v1245 = vunpack.c.l.b16 %v791
  %v1246 = vunpack.c.h.b16 %v791
  %v1247 = vunpack.c.l.b16 %v792
  %v1248 = vunpack.c.h.b16 %v792
  %v1249 = vunpack.c.l.b16 %v793
  %v1250 = vunpack.c.h.b16 %v793
  %v1251 = vunpack.c.l.b16 %v794
  %v1252 = vunpack.c.h.b16 %v794
  %v1253 = vunpack.c.l.b16 %v795
  %v1254 = vunpack.c.h.b16 %v795
  %v1255 = vunpack.c.l.b16 %v796
  %v1256 = vunpack.c.h.b16 %v796
  %v1257 = vunpack.c.l.b16 %v797
  %v1258 = vunpack.c.h.b16 %v797
  %v1259 = vunpack.c.l.b16 %v798
  %v1260 = vunpack.c.h.b16 %v798
  %v1261 = vunpack.c.l.b16 %v799
  %v1262 = vunpack.c.h.b16 %v799
  %v1263 = vunpack.c.l.b16 %v800
  %v1264 = vunpack.c.h.b16 %v800
  %v1265 = vunpack.c.l.b16 %v801
  %v1266 = vunpack.c.h.b16 %v801
  %v1267 = vunpack.c.l.b16 %v802
  %v1268 = vunpack.c.h.b16 %v802
  %v1269 = vunpack.c.l.b16 %v803
  %v1270 = vunpack.c.h.b16 %v803
  %v1271 = vunpack.c.l.b16 %v804
  %v1272 = vunpack.c.h.b16 %v804
  %v1273 = vunpack.c.l.b16 %v805
  %v1274 = vunpack.c.h.b16 %v805
  %v1275 = vunpack.c.l.b16 %v806
  %v1276 = vunpack.c.h.b16 %v806
  %v1277 = vunpack.c.l.b16 %v807
  %v1278 = vunpack.c.h.b16 %v807
  %v1279 = vunpack.c.l.b16 %v808
  %v1280 = vunpack.c.h.b16 %v808
  %v1281 = vunpack.c.l.b16 %v809
  %v1282 = vunpack.c.h.b16 %v809
  %v1283 = vunpack.c.l.b16 %v810
  %v1284 = vunpack.c.h.b16 %v810
  %v1285 = vunpack.c.l.b16 %v811
  %v1286 = vunpack.c.h.b16 %v811
  %v1287 = vunpack.c.l.b16 %v812
  %v1288 = vunpack.c.h.b16 %v812
  %v1289 = vunpack.c.l.b16 %v813
  %v1290 = vunpack.c.h.b16 %v813
  %v1291 = vunpack.c.l.b16 %v814
  %v1292 = vunpack.c.h.b16 %v814
  %v1293 = vunpack.c.l.b16 %v815
  %v1294 = vunpack.c.h.b16 %v815
  %v1295 = vunpack.c.l.b16 %v816
  %v1296 = vunpack.c.h.b16 %v816
  %v1297 = vunpack.c.l.b16 %v817
  %v1298 = vunpack.c.h.b16 %v817
  %v1299 = vunpack.c.l.b16 %v818
  %v1300 = vunpack.c.h.b16 %v818
  %v1301 = vunpack.c.l.b16 %v819
  %v1302 = vunpack.c.h.b16 %v819
  %v1303 = vunpack.c.l.b16 %v820
  %v1304 = vunpack.c.h.b16 %v820
  %v1305 = vunpack.c.l.b16 %v821
  %v1306 = vunpack.c.h.b16 %v821
  %v1307 = vunpack.c.l.b16 %v822
  %v1308 = vunpack.c.h.b16 %v822
  %v1309 = vunpack.c.l.b16 %v823
  %v1310 = vunpack.c.h.b16 %v823
  %v1311 = vunpack.c.l.b16 %v824
  %v1312 = vunpack.c.h.b16 %v824
  %v1313 = vunpack.c.l.b16 %v825
  %v1314 = vunpack.c.h.b16 %v825
  %v1315 = vunpack.c.l.b16 %v826
  %v1316 = vunpack.c.h.b16 %v826
  %v1317 = vunpack.c.l.b16 %v827
  %v1318 = vunpack.c.h.b16 %v827
  %v1319 = vunpack.c.l.b16 %v828
  %v1320 = vunpack.c.h.b16 %v828
  %v1321 = vunpack.c.l.b16 %v829
  %v1322 = vunpack.c.h.b16 %v829
  %v1323 = vunpack.c.l.b16 %v830
  %v1324 = vunpack.c.h.b16 %v830
  %v1325 = vunpack.c.l.b16 %v831
  %v1326 = vunpack.c.h.b16 %v831
  %v1327 = vunpack.c.l.b16 %v832
  %v1328 = vunpack.c.h.b16 %v832
  %v1329 = vunpack.c.l.b16 %v833
  %v1330 = vunpack.c.h.b16 %v833
  %v1331 = vunpack.c.l.b16 %v834
  %v1332 = vunpack.c.h.b16 %v834
  %v1333 = vunpack.c.l.b16 %v835
  %v1334 = vunpack.c.h.b16 %v835
  %v1335 = vunpack.c.l.b16 %v836
  %v1336 = vunpack.c.h.b16 %v836
  %v1337 = vunpack.c.l.b16 %v837
  %v1338 = vunpack.c.h.b16 %v837
  %v1339 = vunpack.c.l.b16 %v838
  %v1340 = vunpack.c.h.b16 %v838
  %v1341 = vunpack.c.l.b16 %v839
  %v1342 = vunpack.c.h.b16 %v839
  %v1343 = vunpack.c.l.b16 %v840
  %v1344 = vunpack.c.h.b16 %v840
  %v1345 = vunpack.c.l.b16 %v841
  %v1346 = vunpack.c.h.b16 %v841
  %v1347 = vunpack.c.l.b16 %v842
  %v1348 = vunpack.c.h.b16 %v842
  %v1349 = vunpack.c.l.b16 %v843
  %v1350 = vunpack.c.h.b16 %v843
  %v1351 = vunpack.c.l.b16 %v844
  %v1352 = vunpack.c.h.b16 %v844
  %v1353 = vunpack.c.l.b16 %v845
  %v1354 = vunpack.c.h.b16 %v845
  %v1355 = vunpack.c.l.b16 %v846
  %v1356 = vunpack.c.h.b16 %v846
  %v1357 = vunpack.c.l.b16 %v847
  %v1358 = vunpack.c.h.b16 %v847
  %v1359 = vunpack.c.l.b16 %v848
  %v1360 = vunpack.c.h.b16 %v848
  %v1361 = vunpack.c.l.b16 %v849
  %v1362 = vunpack.c.h.b16 %v849
  %v1363 = vunpack.c.l.b16 %v850
  %v1364 = vunpack.c.h.b16 %v850
  %v1365 = vunpack.c.l.b16 %v851
  %v1366 = vunpack.c.h.b16 %v851
  %v1367 = vunpack.c.l.b16 %v852
  %v1368 = vunpack.c.h.b16 %v852
  %v1369 = vunpack.c.l.b16 %v853
  %v1370 = vunpack.c.h.b16 %v853
  %v1371 = vunpack.c.l.b16 %v854
  %v1372 = vunpack.c.h.b16 %v854
  %v1373 = vunpack.c.l.b16 %v855
  %v1374 = vunpack.c.h.b16 %v855
  %v1375 = vunpack.c.l.b16 %v856
  %v1376 = vunpack.c.h.b16 %v856
  %v1377 = vunpack.c.l.b16 %v857
  %v1378 = vunpack.c.h.b16 %v857
  %v1379 = vunpack.c.l.b16 %v858
  %v1380 = vunpack.c.h.b16 %v858
  %v1381 = vunpack.c.l.b16 %v859
  %v1382 = vunpack.c.h.b16 %v859
  %v1383 = vunpack.c.l.b16 %v860
  %v1384 = vunpack.c.h.b16 %v860
  %v1385 = vunpack.c.l.b16 %v861
  %v1386 = vunpack.c.h.b16 %v861
  %v1387 = vunpack.c.l.b16 %v862
  %v1388 = vunpack.c.h.b16 %v862
  %v1389 = vunpack.c.l.b16 %v863
  %v1390 = vunpack.c.h.b16 %v863
  %v1391 = vunpack.c.l.b16 %v864
  %v1392 = vunpack.c.h.b16 %v864
  %v1393 = vunpack.c.l.b16 %v865
  %v1394 = vunpack.c.h.b16 %v865
  %v1395 = vunpack.c.l.b16 %v866
  %v1396 = vunpack.c.h.b16 %v866
  %v1397 = vunpack.c.l.b16 %v867
  %v1398 = vunpack.c.h.b16 %v867
  %v1399 = vunpack.c.l.b16 %v868
  %v1400 = vunpack.c.h.b16 %v868
  %v1401 = vunpack.c.l.b16 %v869
  %v1402 = vunpack.c.h.b16 %v869
  %v1403 = vunpack.c.l.b16 %v870
  %v1404 = vunpack.c.h.b16 %v870
  %v1405 = vunpack.c.l.b16 %v871
  %v1406 = vunpack.c.h.b16 %v871
  %v1407 = vunpack.c.l.b16 %v872
  %v1408 = vunpack.c.h.b16 %v872
  %v1409 = vunpack.c.l.b16 %v873
  %v1410 = vunpack.c.h.b16 %v873
  %v1411 = vunpack.c.l.b16 %v874
  %v1412 = vunpack.c.h.b16 %v874
  %v1413 = vunpack.c.l.b16 %v875
  %v1414 = vunpack.c.h.b16 %v875
  %v1415 = vunpack.c.l.b16 %v876
  %v1416 = vunpack.c.h.b16 %v876
  %v1417 = vunpack.c.l.b16 %v877
  %v1418 = vunpack.c.h.b16 %v877
  %v1419 = vunpack.c.l.b16 %v878
  %v1420 = vunpack.c.h.b16 %v878
  %v1421 = vunpack.c.l.b16 %v879
  %v1422 = vunpack.c.h.b16 %v879
  %v1423 = vunpack.c.l.b16 %v880
  %v1424 = vunpack.c.h.b16 %v880
  %v1425 = vunpack.c.l.b16 %v881
  %v1426 = vunpack.c.h.b16 %v881
  %v1427 = vunpack.c.l.b16 %v882
  %v1428 = vunpack.c.h.b16 %v882
  %v1429 = vunpack.c.l.b16 %v883
  %v1430 = vunpack.c.h.b16 %v883
  %v1431 = vunpack.c.l.b16 %v884
  %v1432 = vunpack.c.h.b16 %v884
  %v1433 = vunpack.c.l.b16 %v885
  %v1434 = vunpack.c.h.b16 %v885
  %v1435 = vunpack.c.l.b16 %v886
  %v1436 = vunpack.c.h.b16 %v886
  %v1437 = vunpack.c.l.b16 %v887
  %v1438 = vunpack.c.h.b16 %v887
  %v1439 = vunpack.c.l.b16 %v888
  %v1440 = vunpack.c.h.b16 %v888
  %v1441 = vunpack.c.l.b16 %v889
  %v1442 = vunpack.c.h.b16 %v889
  %v1443 = vunpack.c.l.b16 %v890
  %v1444 = vunpack.c.h.b16 %v890
  %v1445 = vunpack.c.l.b16 %v891
  %v1446 = vunpack.c.h.b16 %v891
  %v1447 = vunpack.c.l.b16 %v892
  %v1448 = vunpack.c.h.b16 %v892
  %v1449 = vunpack.c.l.b16 %v893
  %v1450 = vunpack.c.h.b16 %v893
  %v1451 = vunpack.c.l.b16 %v894
  %v1452 = vunpack.c.h.b16 %v894
  %v1453 = vunpack.c.l.b16 %v895
  %v1454 = vunpack.c.h.b16 %v895
  %v1455 = vunpack.c.l.b16 %v896
  %v1456 = vunpack.c.h.b16 %v896
  %v1457 = vunpack.c.l.b16 %v897
  %v1458 = vunpack.c.h.b16 %v897
  %v1459 = vunpack.c.l.b16 %v898
  %v1460 = vunpack.c.h.b16 %v898
  %v1461 = vunpack.c.l.b16 %v899
  %v1462 = vunpack.c.h.b16 %v899
  %v1463 = vunpack.c.l.b16 %v900
  %v1464 = vunpack.c.h.b16 %v900
  %v1465 = vunpack.c.l.b16 %v901
  %v1466 = vunpack.c.h.b16 %v901
  %v1467 = vunpack.c.l.b16 %v902
  %v1468 = vunpack.c.h.b16 %v902
  %v1469 = vunpack.c.l.b16 %v903
  %v1470 = vunpack.c.h.b16 %v903
  %v1471 = vunpack.c.l.b16 %v904
  %v1472 = vunpack.c.h.b16 %v904
  %v1473 = vunpack.c.l.b16 %v905
  %v1474 = vunpack.c.h.b16 %v905
  %v1475 = vunpack.c.l.b16 %v906
  %v1476 = vunpack.c.h.b16 %v906
  %v1477 = vunpack.c.l.b16 %v907
  %v1478 = vunpack.c.h.b16 %v907
  %v1479 = vunpack.c.l.b16 %v908
  %v1480 = vunpack.c.h.b16 %v908
  %v1481 = vunpack.c.l.b16 %v909
  %v1482 = vunpack.c.h.b16 %v909
  %v1483 = vunpack.c.l.b16 %v910
  %v1484 = vunpack.c.h.b16 %v910
  %v1485 = vunpack.c.l.b16 %v911
  %v1486 = vunpack.c.h.b16 %v911
  %v1487 = vunpack.c.l.b16 %v912
  %v1488 = vunpack.c.h.b16 %v912
  %v1489 = vunpack.c.l.b16 %v913
  %v1490 = vunpack.c.h.b16 %v913
  %v1491 = vunpack.c.l.b16 %v914
  %v1492 = vunpack.c.h.b16 %v914
  %v1493 = vunpack.c.l.b16 %v915
  %v1494 = vunpack.c.h.b16 %v915
  %v1495 = vunpack.c.l.b16 %v916
  %v1496 = vunpack.c.h.b16 %v916
  %v1497 = vunpack.c.l.b16 %v917
  %v1498 = vunpack.c.h.b16 %v917
  %v1499 = vunpack.c.l.b16 %v918
  %v1500 = vunpack.c.h.b16 %v918
  %v1501 = vunpack.c.l.b16 %v919
  %v1502 = vunpack.c.h.b16 %v919
  %v1503 = vunpack.c.l.b16 %v920
  %v1504 = vunpack.c.h.b16 %v920
  %v1505 = vunpack.c.l.b16 %v921
  %v1506 = vunpack.c.h.b16 %v921
  %v1507 = vunpack.c.l.b16 %v922
  %v1508 = vunpack.c.h.b16 %v922
  %v1509 = vunpack.c.l.b16 %v923
  %v1510 = vunpack.c.h.b16 %v923
  %v1511 = vunpack.c.l.b16 %v924
  %v1512 = vunpack.c.h.b16 %v924
  %v1513 = vunpack.c.l.b16 %v925
  %v1514 = vunpack.c.h.b16 %v925
  %v1515 = vunpack.c.l.b16 %v926
  %v1516 = vunpack.c.h.b16 %v926
  %v1517 = vunpack.c.l.b16 %v927
  %v1518 = vunpack.c.h.b16 %v927
  %v1519 = vunpack.c.l.b16 %v928
  %v1520 = vunpack.c.h.b16 %v928
  %v1521 = vunpack.c.l.b16 %v929
  %v1522 = vunpack.c.h.b16 %v929
  %v1523 = vunpack.c.l.b16 %v930
  %v1524 = vunpack.c.h.b16 %v930
  %v1525 = vunpack.c.l.b16 %v931
  %v1526 = vunpack.c.h.b16 %v931
  %v1527 = vunpack.c.l.b16 %v932
  %v1528 = vunpack.c.h.b16 %v932
  %v1529 = vunpack.c.l.b16 %v933
  %v1530 = vunpack.c.h.b16 %v933
  %v1531 = vunpack.c.l.b16 %v934
  %v1532 = vunpack.c.h.b16 %v934
  %v1533 = vunpack.c.l.b16 %v935
  %v1534 = vunpack.c.h.b16 %v935
  %v1535 = vunpack.c.l.b16 %v936
  %v1536 = vunpack.c.h.b16 %v936
  %v1537 = vunpack.c.l.b16 %v937
  %v1538 = vunpack.c.h.b16 %v937
  %v1539 = vunpack.c.l.b16 %v938
  %v1540 = vunpack.c.h.b16 %v938
  %v1541 = vunpack.c.l.b16 %v939
  %v1542 = vunpack.c.h.b16 %v939
  %v1543 = vunpack.c.l.b16 %v940
  %v1544 = vunpack.c.h.b16 %v940
  %v1545 = vunpack.c.l.b16 %v941
  %v1546 = vunpack.c.h.b16 %v941
  %v1547 = vunpack.c.l.b16 %v942
  %v1548 = vunpack.c.h.b16 %v942
  %v1549 = vunpack.c.l.b16 %v943
  %v1550 = vunpack.c.h.b16 %v943
  %v1551 = vunpack.c.l.b16 %v944
  %v1552 = vunpack.c.h.b16 %v944
  %v1553 = vpack.c.b16 %v1175, %v1169
  %v1554 = vpack.c.b16 %v1176, %v1170
  %v1555 = vpack.c.b16 %v1177, %v1171
  %v1556 = vpack.c.b16 %v1178, %v1172
  %v1557 = vpack.c.b16 %v1179, %v1173
  %v1558 = vpack.c.b16 %v1180, %v1174
  %v1559 = vpack.c.b16 %v1187, %v1181
  %v1560 = vpack.c.b16 %v1188, %v1182
  %v1561 = vpack.c.b16 %v1189, %v1183
  %v1562 = vpack.c.b16 %v1190, %v1184
  %v1563 = vpack.c.b16 %v1191, %v1185
  %v1564 = vpack.c.b16 %v1192, %v1186
  %v1565 = vpack.c.b16 %v1199, %v1193
  %v1566 = vpack.c.b16 %v1200, %v1194
  %v1567 = vpack.c.b16 %v1201, %v1195
  %v1568 = vpack.c.b16 %v1202, %v1196
  %v1569 = vpack.c.b16 %v1203, %v1197
  %v1570 = vpack.c.b16 %v1204, %v1198
  %v1571 = vpack.c.b16 %v1211, %v1205
  %v1572 = vpack.c.b16 %v1212, %v1206
  %v1573 = vpack.c.b16 %v1213, %v1207
  %v1574 = vpack.c.b16 %v1214, %v1208
  %v1575 = vpack.c.b16 %v1215, %v1209
  %v1576 = vpack.c.b16 %v1216, %v1210
  %v1577 = vpack.c.b16 %v1223, %v1217
  %v1578 = vpack.c.b16 %v1224, %v1218
  %v1579 = vpack.c.b16 %v1225, %v1219
  %v1580 = vpack.c.b16 %v1226, %v1220
  %v1581 = vpack.c.b16 %v1227, %v1221
  %v1582 = vpack.c.b16 %v1228, %v1222
  %v1583 = vpack.c.b16 %v1235, %v1229
  %v1584 = vpack.c.b16 %v1236, %v1230
  %v1585 = vpack.c.b16 %v1237, %v1231
  %v1586 = vpack.c.b16 %v1238, %v1232
  %v1587 = vpack.c.b16 %v1239, %v1233
  %v1588 = vpack.c.b16 %v1240, %v1234
  %v1589 = vpack.c.b16 %v1247, %v1241
  %v1590 = vpack.c.b16 %v1248, %v1242
  %v1591 = vpack.c.b16 %v1249, %v1243
  %v1592 = vpack.c.b16 %v1250, %v1244
  %v1593 = vpack.c.b16 %v1251, %v1245
  %v1594 = vpack.c.b16 %v1252, %v1246
  %v1595 = vpack.c.b16 %v1259, %v1253
  %v1596 = vpack.c.b16 %v1260, %v1254
  %v1597 = vpack.c.b16 %v1261, %v1255
  %v1598 = vpack.c.b16 %v1262, %v1256
  %v1599 = vpack.c.b16 %v1263, %v1257
  %v1600 = vpack.c.b16 %v1264, %v1258
  %v1601 = vpack.c.b16 %v1271, %v1265
  %v1602 = vpack.c.b16 %v1272, %v1266
  %v1603 = vpack.c.b16 %v1273, %v1267
  %v1604 = vpack.c.b16 %v1274, %v1268
  %v1605 = vpack.c.b16 %v1275, %v1269
  %v1606 = vpack.c.b16 %v1276, %v1270
  %v1607 = vpack.c.b16 %v1283, %v1277
  %v1608 = vpack.c.b16 %v1284, %v1278
  %v1609 = vpack.c.b16 %v1285, %v1279
  %v1610 = vpack.c.b16 %v1286, %v1280
  %v1611 = vpack.c.b16 %v1287, %v1281
  %v1612 = vpack.c.b16 %v1288, %v1282
  %v1613 = vpack.c.b16 %v1295, %v1289
  %v1614 = vpack.c.b16 %v1296, %v1290
  %v1615 = vpack.c.b16 %v1297, %v1291
  %v1616 = vpack.c.b16 %v1298, %v1292
  %v1617 = vpack.c.b16 %v1299, %v1293
  %v1618 = vpack.c.b16 %v1300, %v1294
  %v1619 = vpack.c.b16 %v1307, %v1301
  %v1620 = vpack.c.b16 %v1308, %v1302
  %v1621 = vpack.c.b16 %v1309, %v1303
  %v1622 = vpack.c.b16 %v1310, %v1304
  %v1623 = vpack.c.b16 %v1311, %v1305
  %v1624 = vpack.c.b16 %v1312, %v1306
  %v1625 = vpack.c.b16 %v1319, %v1313
  %v1626 = vpack.c.b16 %v1320, %v1314
  %v1627 = vpack.c.b16 %v1321, %v1315
  %v1628 = vpack.c.b16 %v1322, %v1316
  %v1629 = vpack.c.b16 %v1323, %v1317
  %v1630 = vpack.c.b16 %v1324, %v1318
  %v1631 = vpack.c.b16 %v1331, %v1325
  %v1632 = vpack.c.b16 %v1332, %v1326
  %v1633 = vpack.c.b16 %v1333, %v1327
  %v1634 = vpack.c.b16 %v1334, %v1328
  %v1635 = vpack.c.b16 %v1335, %v1329
  %v1636 = vpack.c.b16 %v1336, %v1330
  %v1637 = vpack.c.b16 %v1343, %v1337
  %v1638 = vpack.c.b16 %v1344, %v1338
  %v1639 = vpack.c.b16 %v1345, %v1339
  %v1640 = vpack.c.b16 %v1346, %v1340
  %v1641 = vpack.c.b16 %v1347, %v1341
  %v1642 = vpack.c.b16 %v1348, %v1342
  %v1643 = vpack.c.b16 %v1355, %v1349
  %v1644 = vpack.c.b16 %v1356, %v1350
  %v1645 = vpack.c.b16 %v1357, %v1351
  %v1646 = vpack.c.b16 %v1358, %v1352
  %v1647 = vpack.c.b16 %v1359, %v1353
  %v1648 = vpack.c.b16 %v1360, %v1354
  %v1649 = vpack.c.b16 %v1367, %v1361
  %v1650 = vpack.c.b16 %v1368, %v1362
  %v1651 = vpack.c.b16 %v1369, %v1363
  %v1652 = vpack.c.b16 %v1370, %v1364
  %v1653 = vpack.c.b16 %v1371, %v1365
  %v1654 = vpack.c.b16 %v1372, %v1366
  %v1655 = vpack.c.b16 %v1379, %v1373
  %v1656 = vpack.c.b16 %v1380, %v1374
  %v1657 = vpack.c.b16 %v1381, %v1375
  %v1658 = vpack.c.b16 %v1382, %v1376
  %v1659 = vpack.c.b16 %v1383, %v1377
  %v1660 = vpack.c.b16 %v1384, %v1378
  %v1661 = vpack.c.b16 %v1391, %v1385
  %v1662 = vpack.c.b16 %v1392, %v1386
  %v1663 = vpack.c.b16 %v1393, %v1387
  %v1664 = vpack.c.b16 %v1394, %v1388
  %v1665 = vpack.c.b16 %v1395, %v1389
  %v1666 = vpack.c.b16 %v1396, %v1390
  %v1667 = vpack.c.b16 %v1403, %v1397
  %v1668 = vpack.c.b16 %v1404, %v1398
  %v1669 = vpack.c.b16 %v1405, %v1399
  %v1670 = vpack.c.b16 %v1406, %v1400
  %v1671 = vpack.c.b16 %v1407, %v1401
  %v1672 = vpack.c.b16 %v1408, %v1402
  %v1673 = vpack.c.b16 %v1415, %v1409
  %v1674 = vpack.c.b16 %v1416, %v1410
  %v1675 = vpack.c.b16 %v1417, %v1411
  %v1676 = vpack.c.b16 %v1418, %v1412
  %v1677 = vpack.c.b16 %v1419, %v1413
  %v1678 = vpack.c.b16 %v1420, %v1414
  %v1679 = vpack.c.b16 %v1427, %v1421
  %v1680 = vpack.c.b16 %v1428, %v1422
  %v1681 = vpack.c.b16 %v1429, %v1423
  %v1682 = vpack.c.b16 %v1430, %v1424
  %v1683 = vpack.c.b16 %v1431, %v1425
  %v1684 = vpack.c.b16 %v1432, %v1426
  %v1685 = vpack.c.b16 %v1439, %v1433
  %v1686 = vpack.c.b16 %v1440, %v1434
  %v1687 = vpack.c.b16 %v1441, %v1435
  %v1688 = vpack.c.b16 %v1442, %v1436
  %v1689 = vpack.c.b16 %v1443, %v1437
  %v1690 = vpack.c.b16 %v1444, %v1438
  %v1691 = vpack.c.b16 %v1451, %v1445
  %v1692 = vpack.c.b16 %v1452, %v1446
  %v1693 = vpack.c.b16 %v1453, %v1447
  %v1694 = vpack.c.b16 %v1454, %v1448
  %v1695 = vpack.c.b16 %v1455, %v1449
  %v1696 = vpack.c.b16 %v1456, %v1450
  %v1697 = vpack.c.b16 %v1463, %v1457
  %v1698 = vpack.c.b16 %v1464, %v1458
  %v1699 = vpack.c.b16 %v1465, %v1459
  %v1700 = vpack.c.b16 %v1466, %v1460
  %v1701 = vpack.c.b16 %v1467, %v1461
  %v1702 = vpack.c.b16 %v1468, %v1462
  %v1703 = vpack.c.b16 %v1475, %v1469
  %v1704 = vpack.c.b16 %v1476, %v1470
  %v1705 = vpack.c.b16 %v1477, %v1471
  %v1706 = vpack.c.b16 %v1478, %v1472
  %v1707 = vpack.c.b16 %v1479, %v1473
  %v1708 = vpack.c.b16 %v1480, %v1474
  %v1709 = vpack.c.b16 %v1487, %v1481
  %v1710 = vpack.c.b16 %v1488, %v1482
  %v1711 = vpack.c.b16 %v1489, %v1483
  %v1712 = vpack.c.b16 %v1490, %v1484
  %v1713 = vpack.c.b16 %v1491, %v1485
  %v1714 = vpack.c.b16 %v1492, %v1486
  %v1715 = vpack.c.b16 %v1499, %v1493
  %v1716 = vpack.c.b16 %v1500, %v1494
  %v1717 = vpack.c.b16 %v1501, %v1495
  %v1718 = vpack.c.b16 %v1502, %v1496
  %v1719 = vpack.c.b16 %v1503, %v1497
  %v1720 = vpack.c.b16 %v1504, %v1498
  %v1721 = vpack.c.b16 %v1511, %v1505
  %v1722 = vpack.c.b16 %v1512, %v1506
  %v1723 = vpack.c.b16 %v1513, %v1507
  %v1724 = vpack.c.b16 %v1514, %v1508
  %v1725 = vpack.c.b16 %v1515, %v1509
  %v1726 = vpack.c.b16 %v1516, %v1510
  %v1727 = vpack.c.b16 %v1523, %v1517
  %v1728 = vpack.c.b16 %v1524, %v1518
  %v1729 = vpack.c.b16 %v1525, %v1519
  %v1730 = vpack.c.b16 %v1526, %v1520
  %v1731 = vpack.c.b16 %v1527, %v1521
  %v1732 = vpack.c.b16 %v1528, %v1522
  %v1733 = vpack.c.b16 %v1535, %v1529
  %v1734 = vpack.c.b16 %v1536, %v1530
  %v1735 = vpack.c.b16 %v1537, %v1531
  %v1736 = vpack.c.b16 %v1538, %v1532
  %v1737 = vpack.c.b16 %v1539, %v1533
  %v1738 = vpack.c.b16 %v1540, %v1534
  %v1739 = vpack.c.b16 %v1547, %v1541
  %v1740 = vpack.c.b16 %v1548, %v1542
  %v1741 = vpack.c.b16 %v1549, %v1543
  %v1742 = vpack.c.b16 %v1550, %v1544
  %v1743 = vpack.c.b16 %v1551, %v1545
  %v1744 = vpack.c.b16 %v1552, %v1546
  %1937 = vmatprep.subr.bf16.mxu0 %v1554
  %1938 = vmatpush1.bf16.msra.mxu0 %v1553
  %1939 = vmatprep.subr.bf16.mxu0 %v1560
  %1940 = vmatpush1.bf16.msra.mxu0 %v1559
  %1941 = vmatprep.subr.bf16.mxu0 %v1566
  %1942 = vmatpush1.bf16.msra.mxu0 %v1565
  %1943 = vmatprep.subr.bf16.mxu0 %v1572
  %1944 = vmatpush1.bf16.msra.mxu0 %v1571
  %1945 = vmatprep.subr.bf16.mxu0 %v1578
  %1946 = vmatpush1.bf16.msra.mxu0 %v1577
  %1947 = vmatprep.subr.bf16.mxu0 %v1584
  %1948 = vmatpush1.bf16.msra.mxu0 %v1583
  %1949 = vmatprep.subr.bf16.mxu0 %v1590
  %1950 = vmatpush1.bf16.msra.mxu0 %v1589
  %1951 = vmatprep.subr.bf16.mxu0 %v1596
  %1952 = vmatpush1.bf16.msra.mxu0 %v1595
  %1953 = vmatprep.subr.bf16.mxu0 %v1602
  %1954 = vmatpush1.bf16.msra.mxu0 %v1601
  %1955 = vmatprep.subr.bf16.mxu0 %v1608
  %1956 = vmatpush1.bf16.msra.mxu0 %v1607
  %1957 = vmatprep.subr.bf16.mxu0 %v1614
  %1958 = vmatpush1.bf16.msra.mxu0 %v1613
  %1959 = vmatprep.subr.bf16.mxu0 %v1620
  %1960 = vmatpush1.bf16.msra.mxu0 %v1619
  %1961 = vmatprep.subr.bf16.mxu0 %v1626
  %1962 = vmatpush1.bf16.msra.mxu0 %v1625
  %1963 = vmatprep.subr.bf16.mxu0 %v1632
  %1964 = vmatpush1.bf16.msra.mxu0 %v1631
  %1965 = vmatprep.subr.bf16.mxu0 %v1638
  %1966 = vmatpush1.bf16.msra.mxu0 %v1637
  %1967 = vmatprep.subr.bf16.mxu0 %v1644
  %1968 = vmatpush1.bf16.msra.mxu0 %v1643
  %1969 = vmatprep.mubr.bf16.mxu0 %v750
  %1970 = vmatmul.mubr.bf16.gmra.mrb[0].mxu0 %v749
  %v1971 = vpop.f32.mrb[0].mxu0
  %v1972 = vadd.f32 %v950, %v1971
  %v1973 = vpop.f32.mrb[0].mxu0
  %v1974 = vadd.f32 %v954, %v1973
  %v1975 = vpop.f32.mrb[0].mxu0
  %v1976 = vpop.f32.mrb[0].mxu0
  %1977 = vdwg.mxu0
  %1978 = vmatprep.subr.bf16.mxu0 %v1650
  %1979 = vmatpush1.bf16.msra.mxu0 %v1649
  %1980 = vmatprep.subr.bf16.mxu0 %v1656
  %1981 = vmatpush1.bf16.msra.mxu0 %v1655
  %1982 = vmatprep.subr.bf16.mxu0 %v1662
  %1983 = vmatpush1.bf16.msra.mxu0 %v1661
  %1984 = vmatprep.subr.bf16.mxu0 %v1668
  %1985 = vmatpush1.bf16.msra.mxu0 %v1667
  %1986 = vmatprep.subr.bf16.mxu0 %v1674
  %1987 = vmatpush1.bf16.msra.mxu0 %v1673
  %1988 = vmatprep.subr.bf16.mxu0 %v1680
  %1989 = vmatpush1.bf16.msra.mxu0 %v1679
  %1990 = vmatprep.subr.bf16.mxu0 %v1686
  %1991 = vmatpush1.bf16.msra.mxu0 %v1685
  %1992 = vmatprep.subr.bf16.mxu0 %v1692
  %1993 = vmatpush1.bf16.msra.mxu0 %v1691
  %1994 = vmatprep.subr.bf16.mxu0 %v1698
  %1995 = vmatpush1.bf16.msra.mxu0 %v1697
  %1996 = vmatprep.subr.bf16.mxu0 %v1704
  %1997 = vmatpush1.bf16.msra.mxu0 %v1703
  %1998 = vmatprep.subr.bf16.mxu0 %v1710
  %1999 = vmatpush1.bf16.msra.mxu0 %v1709
  %2000 = vmatprep.subr.bf16.mxu0 %v1716
  %2001 = vmatpush1.bf16.msra.mxu0 %v1715
  %2002 = vmatprep.subr.bf16.mxu0 %v1722
  %2003 = vmatpush1.bf16.msra.mxu0 %v1721
  %2004 = vmatprep.subr.bf16.mxu0 %v1728
  %2005 = vmatpush1.bf16.msra.mxu0 %v1727
  %2006 = vmatprep.subr.bf16.mxu0 %v1734
  %2007 = vmatpush1.bf16.msra.mxu0 %v1733
  %2008 = vmatprep.subr.bf16.mxu0 %v1740
  %2009 = vmatpush1.bf16.msra.mxu0 %v1739
  %2010 = vmatprep.mubr.bf16.mxu0 %v752
  %2011 = vmatmul.mubr.bf16.gmra.mrb[0].mxu0 %v751
  %v2012 = vpop.f32.mrb[0].mxu0
  %v2013 = vadd.f32 %v1972, %v2012
  %v2014 = vpop.f32.mrb[0].mxu0
  %v2015 = vadd.f32 %v1974, %v2014
  %v2016 = vpop.f32.mrb[0].mxu0
  %v2017 = vpop.f32.mrb[0].mxu0
  %2018 = vdwg.mxu0
  %2019 = vmatprep.subr.bf16.mxu0 %v1556
  %2020 = vmatpush1.bf16.msra.mxu0 %v1555
  %2021 = vmatprep.subr.bf16.mxu0 %v1562
  %2022 = vmatpush1.bf16.msra.mxu0 %v1561
  %2023 = vmatprep.subr.bf16.mxu0 %v1568
  %2024 = vmatpush1.bf16.msra.mxu0 %v1567
  %2025 = vmatprep.subr.bf16.mxu0 %v1574
  %2026 = vmatpush1.bf16.msra.mxu0 %v1573
  %2027 = vmatprep.subr.bf16.mxu0 %v1580
  %2028 = vmatpush1.bf16.msra.mxu0 %v1579
  %2029 = vmatprep.subr.bf16.mxu0 %v1586
  %2030 = vmatpush1.bf16.msra.mxu0 %v1585
  %2031 = vmatprep.subr.bf16.mxu0 %v1592
  %2032 = vmatpush1.bf16.msra.mxu0 %v1591
  %2033 = vmatprep.subr.bf16.mxu0 %v1598
  %2034 = vmatpush1.bf16.msra.mxu0 %v1597
  %2035 = vmatprep.subr.bf16.mxu0 %v1604
  %2036 = vmatpush1.bf16.msra.mxu0 %v1603
  %2037 = vmatprep.subr.bf16.mxu0 %v1610
  %2038 = vmatpush1.bf16.msra.mxu0 %v1609
  %2039 = vmatprep.subr.bf16.mxu0 %v1616
  %2040 = vmatpush1.bf16.msra.mxu0 %v1615
  %2041 = vmatprep.subr.bf16.mxu0 %v1622
  %2042 = vmatpush1.bf16.msra.mxu0 %v1621
  %2043 = vmatprep.subr.bf16.mxu0 %v1628
  %2044 = vmatpush1.bf16.msra.mxu0 %v1627
  %2045 = vmatprep.subr.bf16.mxu0 %v1634
  %2046 = vmatpush1.bf16.msra.mxu0 %v1633
  %2047 = vmatprep.subr.bf16.mxu0 %v1640
  %2048 = vmatpush1.bf16.msra.mxu0 %v1639
  %2049 = vmatprep.subr.bf16.mxu0 %v1646
  %2050 = vmatpush1.bf16.msra.mxu0 %v1645
  %2051 = vmatprep.mubr.bf16.mxu0 %v750
  %2052 = vmatmul.mubr.bf16.gmra.mrb[0].mxu0 %v749
  %v2053 = vpop.f32.mrb[0].mxu0
  %v2054 = vadd.f32 %v958, %v2053
  %v2055 = vpop.f32.mrb[0].mxu0
  %v2056 = vadd.f32 %v962, %v2055
  %v2057 = vpop.f32.mrb[0].mxu0
  %v2058 = vpop.f32.mrb[0].mxu0
  %2059 = vdwg.mxu0
  %2060 = vmatprep.subr.bf16.mxu0 %v1652
  %2061 = vmatpush1.bf16.msra.mxu0 %v1651
  %2062 = vmatprep.subr.bf16.mxu0 %v1658
  %2063 = vmatpush1.bf16.msra.mxu0 %v1657
  %2064 = vmatprep.subr.bf16.mxu0 %v1664
  %2065 = vmatpush1.bf16.msra.mxu0 %v1663
  %2066 = vmatprep.subr.bf16.mxu0 %v1670
  %2067 = vmatpush1.bf16.msra.mxu0 %v1669
  %2068 = vmatprep.subr.bf16.mxu0 %v1676
  %2069 = vmatpush1.bf16.msra.mxu0 %v1675
  %2070 = vmatprep.subr.bf16.mxu0 %v1682
  %2071 = vmatpush1.bf16.msra.mxu0 %v1681
  %2072 = vmatprep.subr.bf16.mxu0 %v1688
  %2073 = vmatpush1.bf16.msra.mxu0 %v1687
  %2074 = vmatprep.subr.bf16.mxu0 %v1694
  %2075 = vmatpush1.bf16.msra.mxu0 %v1693
  %2076 = vmatprep.subr.bf16.mxu0 %v1700
  %2077 = vmatpush1.bf16.msra.mxu0 %v1699
  %2078 = vmatprep.subr.bf16.mxu0 %v1706
  %2079 = vmatpush1.bf16.msra.mxu0 %v1705
  %2080 = vmatprep.subr.bf16.mxu0 %v1712
  %2081 = vmatpush1.bf16.msra.mxu0 %v1711
  %2082 = vmatprep.subr.bf16.mxu0 %v1718
  %2083 = vmatpush1.bf16.msra.mxu0 %v1717
  %2084 = vmatprep.subr.bf16.mxu0 %v1724
  %2085 = vmatpush1.bf16.msra.mxu0 %v1723
  %2086 = vmatprep.subr.bf16.mxu0 %v1730
  %2087 = vmatpush1.bf16.msra.mxu0 %v1729
  %2088 = vmatprep.subr.bf16.mxu0 %v1736
  %2089 = vmatpush1.bf16.msra.mxu0 %v1735
  %2090 = vmatprep.subr.bf16.mxu0 %v1742
  %2091 = vmatpush1.bf16.msra.mxu0 %v1741
  %2092 = vmatprep.mubr.bf16.mxu0 %v752
  %2093 = vmatmul.mubr.bf16.gmra.mrb[0].mxu0 %v751
  %v2094 = vpop.f32.mrb[0].mxu0
  %v2095 = vadd.f32 %v2054, %v2094
  %v2096 = vpop.f32.mrb[0].mxu0
  %v2097 = vadd.f32 %v2056, %v2096
  %v2098 = vpop.f32.mrb[0].mxu0
  %v2099 = vpop.f32.mrb[0].mxu0
  %2100 = vdwg.mxu0
  %2101 = vmatprep.subr.bf16.mxu0 %v1558
  %2102 = vmatpush1.bf16.msra.mxu0 %v1557
  %2103 = vmatprep.subr.bf16.mxu0 %v1564
  %2104 = vmatpush1.bf16.msra.mxu0 %v1563
  %2105 = vmatprep.subr.bf16.mxu0 %v1570
  %2106 = vmatpush1.bf16.msra.mxu0 %v1569
  %2107 = vmatprep.subr.bf16.mxu0 %v1576
  %2108 = vmatpush1.bf16.msra.mxu0 %v1575
  %2109 = vmatprep.subr.bf16.mxu0 %v1582
  %2110 = vmatpush1.bf16.msra.mxu0 %v1581
  %2111 = vmatprep.subr.bf16.mxu0 %v1588
  %2112 = vmatpush1.bf16.msra.mxu0 %v1587
  %2113 = vmatprep.subr.bf16.mxu0 %v1594
  %2114 = vmatpush1.bf16.msra.mxu0 %v1593
  %2115 = vmatprep.subr.bf16.mxu0 %v1600
  %2116 = vmatpush1.bf16.msra.mxu0 %v1599
  %2117 = vmatprep.subr.bf16.mxu0 %v1606
  %2118 = vmatpush1.bf16.msra.mxu0 %v1605
  %2119 = vmatprep.subr.bf16.mxu0 %v1612
  %2120 = vmatpush1.bf16.msra.mxu0 %v1611
  %2121 = vmatprep.subr.bf16.mxu0 %v1618
  %2122 = vmatpush1.bf16.msra.mxu0 %v1617
  %2123 = vmatprep.subr.bf16.mxu0 %v1624
  %2124 = vmatpush1.bf16.msra.mxu0 %v1623
  %2125 = vmatprep.subr.bf16.mxu0 %v1630
  %2126 = vmatpush1.bf16.msra.mxu0 %v1629
  %2127 = vmatprep.subr.bf16.mxu0 %v1636
  %2128 = vmatpush1.bf16.msra.mxu0 %v1635
  %2129 = vmatprep.subr.bf16.mxu0 %v1642
  %2130 = vmatpush1.bf16.msra.mxu0 %v1641
  %2131 = vmatprep.subr.bf16.mxu0 %v1648
  %2132 = vmatpush1.bf16.msra.mxu0 %v1647
  %2133 = vmatprep.mubr.bf16.mxu0 %v750
  %2134 = vmatmul.mubr.bf16.gmra.mrb[0].mxu0 %v749
  %v2135 = vpop.f32.mrb[0].mxu0
  %v2136 = vadd.f32 %v966, %v2135
  %v2137 = vpop.f32.mrb[0].mxu0
  %v2138 = vadd.f32 %v970, %v2137
  %v2139 = vpop.f32.mrb[0].mxu0
  %v2140 = vpop.f32.mrb[0].mxu0
  %2141 = vdwg.mxu0
  %2142 = vmatprep.subr.bf16.mxu0 %v1654
  %2143 = vmatpush1.bf16.msra.mxu0 %v1653
  %2144 = vmatprep.subr.bf16.mxu0 %v1660
  %2145 = vmatpush1.bf16.msra.mxu0 %v1659
  %2146 = vmatprep.subr.bf16.mxu0 %v1666
  %2147 = vmatpush1.bf16.msra.mxu0 %v1665
  %2148 = vmatprep.subr.bf16.mxu0 %v1672
  %2149 = vmatpush1.bf16.msra.mxu0 %v1671
  %2150 = vmatprep.subr.bf16.mxu0 %v1678
  %2151 = vmatpush1.bf16.msra.mxu0 %v1677
  %2152 = vmatprep.subr.bf16.mxu0 %v1684
  %2153 = vmatpush1.bf16.msra.mxu0 %v1683
  %2154 = vmatprep.subr.bf16.mxu0 %v1690
  %2155 = vmatpush1.bf16.msra.mxu0 %v1689
  %2156 = vmatprep.subr.bf16.mxu0 %v1696
  %2157 = vmatpush1.bf16.msra.mxu0 %v1695
  %2158 = vmatprep.subr.bf16.mxu0 %v1702
  %2159 = vmatpush1.bf16.msra.mxu0 %v1701
  %2160 = vmatprep.subr.bf16.mxu0 %v1708
  %2161 = vmatpush1.bf16.msra.mxu0 %v1707
  %2162 = vmatprep.subr.bf16.mxu0 %v1714
  %2163 = vmatpush1.bf16.msra.mxu0 %v1713
  %2164 = vmatprep.subr.bf16.mxu0 %v1720
  %2165 = vmatpush1.bf16.msra.mxu0 %v1719
  %2166 = vmatprep.subr.bf16.mxu0 %v1726
  %2167 = vmatpush1.bf16.msra.mxu0 %v1725
  %2168 = vmatprep.subr.bf16.mxu0 %v1732
  %2169 = vmatpush1.bf16.msra.mxu0 %v1731
  %2170 = vmatprep.subr.bf16.mxu0 %v1738
  %2171 = vmatpush1.bf16.msra.mxu0 %v1737
  %2172 = vmatprep.subr.bf16.mxu0 %v1744
  %2173 = vmatpush1.bf16.msra.mxu0 %v1743
  %2174 = vmatprep.mubr.bf16.mxu0 %v752
  %2175 = vmatmul.mubr.bf16.gmra.mrb[0].mxu0 %v751
  %v2176 = vpop.f32.mrb[0].mxu0
  %v2177 = vadd.f32 %v2136, %v2176
  %v2178 = vpop.f32.mrb[0].mxu0
  %v2179 = vadd.f32 %v2138, %v2178
  %v2180 = vpop.f32.mrb[0].mxu0
  %v2181 = vpop.f32.mrb[0].mxu0
  %2182 = vdwg.mxu0
  %v2183 = vtanh.pop %v2013
  %v2184 = vtanh.pop %v2015
  %v2185 = vtanh.pop %v2095
  %v2186 = vtanh.pop %v2097
  %v2187 = vtanh.pop %v2177
  %v2188 = vtanh.pop %v2179
  %v2195 = vcombine.low %v2183, %v2184
  %v2196 = vcombine.low %v2185, %v2186
  %v2198 = vunpack.c.l.s4 1983009808
  %v2199 = vunpack.c.0.s8 %v2198
  %v2200 = vlaneseq
  %v2201 = vshrl.u32 %v2200, 7
  %v2202 = vsub.s32 %v2199, %v2201
  %v2203 = vrot.slane %v2195, %v2202
  %v2205 = vunpack.c.l.s4 1983009808
  %v2206 = vunpack.c.0.s8 %v2205
  %v2207 = vlaneseq
  %v2208 = vshrl.u32 %v2207, 7
  %v2209 = vsub.s32 %v2206, %v2208
  %v2210 = vrot.slane %v2196, %v2209
  %v2211 = vcombine.low %v2203, %v2210
  %v2212 = vcombine.low %v2187, %v2188
  %v2214 = vunpack.c.l.s4 1983009808
  %v2215 = vunpack.c.0.s8 %v2214
  %v2216 = vlaneseq
  %v2217 = vshrl.u32 %v2216, 7
  %v2218 = vsub.s32 %v2215, %v2217
  %v2219 = vrot.slane %v2212, %v2218
  %2222 = vst [vmem:[%s9] sm:$0xff] %v2211
  %2223 = vst [vmem:[%s9 + $0x8] sm:$0xf] %v2219
  // Predicated region
  $region38: #{_lambda_.1} parent=0 // pred_check
    _
  $region39: #{_lambda_.1} parent=0 // pred_check_branch
    %2225 = sbr.rel (0) target = $region41
  $region40: #{_lambda_.1} parent=0 // pred_region
    _
  $region41: #{_lambda_.1} parent=0 // pred_fallthru
    _
  // Predicated region
  $region42: #{_lambda_.1} parent=0 // pred_check
    _
  $region43: #{_lambda_.1} parent=0 // pred_check_branch
    %2227 = sbr.rel (0) target = $region45
  $region44: #{_lambda_.1} parent=0 // pred_region
    _
  $region45: #{_lambda_.1} parent=0 // pred_fallthru
    _

</llo_original>
